<compile_context>
chip_gen: v6e
topology: v6e:2x2x1
jax: 0.10.0
libtpu: 0.0.40
codegen_flags: <defaults>
</compile_context>

<pallas_src>
import numpy as np
import jax
import jax.numpy as jnp
from jax.experimental import pallas as pl
from jax.experimental.pallas import tpu as pltpu


# ----------------------------------------------------------------------------------------
# Build-once (wrapper side) constants: lane-space weights, channel gather/scatter, masks.
# ----------------------------------------------------------------------------------------
def _lane_weights_3x3(w_hwio, w_in, stride, k_pad):
    """HWIO (3,3,Cin,Cout) -> (3, k_pad, Wo*Cout) bf16 per-vertical-tap lane-space weights.

    Horizontal taps and width zero-padding are folded into each tap's matrix; the K
    (input-lane) dimension is zero-padded to k_pad (a multiple of 128)."""
    w = np.asarray(w_hwio, np.float32)
    kh, kw, cin, cout = w.shape
    wo_n = (w_in + 2 - kw) // stride + 1
    sel = np.zeros((kw, w_in, wo_n), np.float32)
    for dx in range(kw):
        for wo in range(wo_n):
            wi = wo * stride - 1 + dx
            if 0 <= wi < w_in:
                sel[dx, wi, wo] = 1.0
    t = np.einsum("xwv,yxio->ywivo", sel, w)                  # (dy, w, ci, wo, co)
    t = t.reshape(kh, w_in * cin, wo_n * cout)
    out = np.zeros((kh, k_pad, wo_n * cout), np.float32)
    out[:, : w_in * cin, :] = t
    return jnp.asarray(out, jnp.bfloat16)


def _lane_weight_1x1(w_hwio, w_in, stride, k_pad):
    """HWIO (1,1,Cin,Cout) -> (k_pad, Wo*Cout) bf16 lane-space weight for the 1x1 shortcut."""
    w = np.asarray(w_hwio, np.float32)
    _, _, cin, cout = w.shape
    wo_n = (w_in - 1) // stride + 1
    sel = np.zeros((w_in, wo_n), np.float32)
    for wo in range(wo_n):
        sel[wo * stride, wo] = 1.0
    t = np.einsum("wv,io->wivo", sel, w[0, 0]).reshape(w_in * cin, wo_n * cout)
    out = np.zeros((k_pad, wo_n * cout), np.float32)
    out[: w_in * cin] = t
    return jnp.asarray(out, jnp.bfloat16)


def _tap_masks(h_img, n_img):
    """(3, N*H, 1) f32: zero source rows whose vertical-tap target falls outside its image."""
    rows = h_img * n_img
    q = np.arange(rows) % h_img
    m = np.ones((3, rows, 1), np.float32)
    m[0, q == h_img - 1, 0] = 0.0   # tap dy=0 feeds output row q+1 (must stay in-image)
    m[2, q == 0, 0] = 0.0           # tap dy=2 feeds output row q-1
    return jnp.asarray(m)


def _row_select(n, h_in, h_out, stride):
    """(3, N*H_out, N*H_in) 0/1 vertical-tap row gather (stride>1 fallback path only)."""
    p = np.zeros((3, n * h_out, n * h_in), np.float32)
    for dy in range(3):
        for b in range(n):
            for ho in range(h_out):
                h = ho * stride - 1 + dy
                if 0 <= h < h_in:
                    p[dy, b * h_out + ho, b * h_in + h] = 1.0
    return jnp.asarray(p)


def _row_subsample(n, h_in, h_out, stride):
    """(N*H_out, N*H_in) 0/1 strided row subsample for the shortcut (stride>1 only)."""
    p = np.zeros((n * h_out, n * h_in), np.float32)
    for b in range(n):
        for ho in range(h_out):
            p[b * h_out + ho, b * h_in + ho * stride] = 1.0
    return jnp.asarray(p)


def _full_spec(shape):
    zeros = (0,) * len(shape)
    return pl.BlockSpec(shape, lambda i, z=zeros: z)


# ----------------------------------------------------------------------------------------
# Fused kernel
# ----------------------------------------------------------------------------------------
def _make_resblock_kernel(N, H, W, Cin, Cout, stride, has_shortcut, Kp, eps=1e-5):
    Ho = (H + 2 - 3) // stride + 1
    Wo = (W + 2 - 3) // stride + 1
    WoC = Wo * Cout
    R_in, R_out = N * H, N * Ho
    inv_cnt = 1.0 / float(N * Ho * Wo)

    def kernel(*refs):
        if stride == 1:
            (x_ref, w1_ref, w2_ref, m_ref, g1_ref, b1_ref, g2_ref, b2_ref,
             G_ref, GT_ref, *rest) = refs
            if has_shortcut:
                ws_ref, gs_ref, bs_ref, o_ref, acc_ref = rest
            else:
                o_ref, acc_ref = rest
        else:  # stride > 1 always has a shortcut conv
            (x_ref, w1_ref, w2_ref, p1_ref, p2_ref, g1_ref, b1_ref, g2_ref, b2_ref,
             G_ref, GT_ref, psc_ref, ws_ref, gs_ref, bs_ref, o_ref, acc_ref) = refs

        G = G_ref[...]                                     # (WoC, Cout) channel gather (0/1)
        GT = GT_ref[...]                                   # (Cout, WoC) channel broadcast
        two = jax.lax.broadcasted_iota(jnp.int32, (2, 1), 0)

        def bn(acc, g_r, b_r, relu):
            # Training-mode BatchNorm: batch mean / biased variance, single pass, f32 stats.
            s1 = jnp.sum(acc, axis=0, keepdims=True)                        # (1, WoC)
            s2 = jnp.sum(acc * acc, axis=0, keepdims=True)
            stats = jnp.where(two == 0, s1, s2)                             # (2, WoC) batched
            stats_c = jnp.dot(stats, G, preferred_element_type=jnp.float32) * inv_cnt
            m_c = stats_c[0:1, :]                                           # (1, Cout)
            v_c = jnp.maximum(stats_c[1:2, :] - m_c * m_c, 0.0)
            scale_c = g_r[...] * jax.lax.rsqrt(v_c + eps)
            shift_c = b_r[...] - m_c * scale_c
            ss = jnp.where(two == 0, scale_c, shift_c)                      # (2, Cout) batched
            ss_l = jnp.dot(ss, GT, preferred_element_type=jnp.float32)      # (2, WoC)
            y = acc * ss_l[0:1, :] + ss_l[1:2, :]
            return jnp.maximum(y, 0.0) if relu else y

        x = x_ref[...]                                     # (R_in, Kp) bf16 (lane-padded)

        if stride == 1:
            def conv3x3(src_bf16, w_ref):
                # Three per-tap bf16 MXU dots (f32 accumulate); vertical taps + row padding
                # via offset slice-accumulate into a row-padded scratch + image masks
                # (replaces the previous O(rows^2) row-selection matmuls).
                acc_ref[...] = jnp.zeros((R_out + 2, WoC), jnp.float32)
                acc_ref[pl.ds(1, R_out), :] += jnp.dot(
                    src_bf16, w_ref[1], preferred_element_type=jnp.float32)           # dy=1
                acc_ref[pl.ds(2, R_out), :] += m_ref[0] * jnp.dot(
                    src_bf16, w_ref[0], preferred_element_type=jnp.float32)           # dy=0
                acc_ref[pl.ds(0, R_out), :] += m_ref[2] * jnp.dot(
                    src_bf16, w_ref[2], preferred_element_type=jnp.float32)           # dy=2
                return acc_ref[pl.ds(1, R_out), :]

            y1 = bn(conv3x3(x, w1_ref), g1_ref, b1_ref, relu=True)
            y2 = bn(conv3x3(y1.astype(jnp.bfloat16), w2_ref), g2_ref, b2_ref, relu=False)

            if has_shortcut:
                # No row gather needed at stride 1: plain 1x1 lane-space dot.
                xs = jnp.dot(x, ws_ref[...], preferred_element_type=jnp.float32)
                identity = bn(xs, gs_ref, bs_ref, relu=False)
            else:
                identity = x[:, :WoC].astype(jnp.float32)
            o_ref[...] = jnp.maximum(y2 + identity, 0.0).astype(o_ref.dtype)
        else:
            # TODO(synk): stride>1 keeps the validated 0/1 row-selection matmul fallback;
            # move to strided sublane gathers if a strided config becomes hot.
            xf = x.astype(jnp.float32)

            def conv_p(src_f32, w_ref, p_ref):
                acc = None
                for dy in range(3):
                    ydy = jnp.dot(src_f32, w_ref[dy].astype(jnp.float32),
                                  preferred_element_type=jnp.float32)
                    t = jnp.dot(p_ref[dy], ydy, preferred_element_type=jnp.float32)
                    acc = t if acc is None else acc + t
                return acc

            y1 = bn(conv_p(xf, w1_ref, p1_ref), g1_ref, b1_ref, relu=True)
            y2 = bn(conv_p(y1, w2_ref, p2_ref), g2_ref, b2_ref, relu=False)
            xs_rows = jnp.dot(psc_ref[...], xf, preferred_element_type=jnp.float32)
            identity = bn(jnp.dot(xs_rows, ws_ref[...].astype(jnp.float32),
                                  preferred_element_type=jnp.float32),
                          gs_ref, bs_ref, relu=False)
            o_ref[...] = jnp.maximum(y2 + identity, 0.0).astype(o_ref.dtype)

    return kernel


# ----------------------------------------------------------------------------------------
# Wrapper: builds the constants once (hoisted out of the per-call path), returns jitted fwd.
# ----------------------------------------------------------------------------------------
def make_resblock_forward(params, input_shape, *, stride=1, eps=1e-5):
    N, Cin, H, W = input_shape
    Cout = int(params["w1"].shape[-1])
    Ho = (H + 2 - 3) // stride + 1
    Wo = (W + 2 - 3) // stride + 1
    WoC = Wo * Cout
    R_in, R_out = N * H, N * Ho
    Kin = W * Cin
    Kp = ((Kin + 127) // 128) * 128          # lane/K padding to full 128-lane vregs
    has_shortcut = (stride != 1) or (Cin != Cout)

    def _vec(v):
        return jnp.asarray(v, jnp.float32).reshape(1, Cout)

    g_np = np.tile(np.eye(Cout, dtype=np.float32), (Wo, 1))       # (WoC, Cout)

    consts = [
        _lane_weights_3x3(params["w1"], W, stride, Kp),           # (3, Kp,  WoC) bf16
        _lane_weights_3x3(params["w2"], Wo, 1, WoC),              # (3, WoC, WoC) bf16
    ]
    if stride == 1:
        consts.append(_tap_masks(Ho, N))                          # (3, R_out, 1) f32
    else:
        consts.append(_row_select(N, H, Ho, stride))              # p1
        consts.append(_row_select(N, Ho, Ho, 1))                  # p2
    consts += [_vec(params["g1"]), _vec(params["b1"]),
               _vec(params["g2"]), _vec(params["b2"]),
               jnp.asarray(g_np), jnp.asarray(g_np.T)]
    if stride != 1:
        consts.append(_row_subsample(N, H, Ho, stride))           # psc
    if has_shortcut:
        consts += [_lane_weight_1x1(params["ws"], W, stride, Kp),
                   _vec(params["gs"]), _vec(params["bs"])]

    kernel = _make_resblock_kernel(N, H, W, Cin, Cout, stride, has_shortcut, Kp, eps)

    conv1_macs = 3 * R_in * Kp * WoC
    conv2_macs = 3 * R_out * WoC * WoC
    sc_macs = R_in * Kp * WoC if has_shortcut else 0
    in_bytes = R_in * Kp * 2 + sum(int(np.prod(c.shape)) * c.dtype.itemsize for c in consts)
    cost = pl.CostEstimate(flops=2 * (conv1_macs + conv2_macs + sc_macs),
                           transcendentals=3 * Cout,
                           bytes_accessed=in_bytes + R_out * WoC * 4)

    call = pl.pallas_call(
        kernel,
        out_shape=jax.ShapeDtypeStruct((R_out, WoC), jnp.float32),
        grid=(1,),
        in_specs=[_full_spec((R_in, Kp))] + [_full_spec(tuple(c.shape)) for c in consts],
        out_specs=_full_spec((R_out, WoC)),
        scratch_shapes=[pltpu.VMEM((R_out + 2, WoC), jnp.float32)],   # row-padded conv acc
        compiler_params=pltpu.CompilerParams(
            dimension_semantics=("arbitrary",),
            vmem_limit_bytes=32 * 1024 * 1024),
        cost_estimate=cost,
    )

    @jax.jit
    def forward(x_nchw):
        # NCHW -> NHWC -> lane-dense (N*H, W*Cin) slab, zero-padded to 128-lane K.
        x2d = jnp.transpose(x_nchw, (0, 2, 3, 1)).reshape(R_in, Kin)
        if Kp > Kin:
            x2d = jnp.pad(x2d, ((0, 0), (0, Kp - Kin)))
        out2d = call(x2d.astype(jnp.bfloat16), *consts)
        return jnp.transpose(out2d.reshape(N, Ho, Wo, Cout), (0, 3, 1, 2))

    return forward


# ----------------------------------------------------------------------------------------
# Pure-JAX references (f32 module semantics, and one matching the kernel's bf16 operands)
# ----------------------------------------------------------------------------------------
def _ref_conv(x, w, stride, padding, op_dtype):
    return jax.lax.conv_general_dilated(
        x.astype(op_dtype), w.astype(op_dtype), (stride, stride),
        [(padding, padding), (padding, padding)],
        dimension_numbers=("NHWC", "HWIO", "NHWC"),
        preferred_element_type=jnp.float32,
        precision=jax.lax.Precision.HIGHEST)


def _ref_bn(y, g, b, eps=1e-5):
    mean = jnp.mean(y, axis=(0, 1, 2), keepdims=True)
    var = jnp.var(y, axis=(0, 1, 2), keepdims=True)      # biased, like torch training BN
    return (y - mean) * jax.lax.rsqrt(var + eps) * g.reshape(1, 1, 1, -1) + b.reshape(1, 1, 1, -1)


def resblock_ref(x_nchw, params, *, stride=1, conv_dtype=jnp.float32):
    x = jnp.transpose(x_nchw, (0, 2, 3, 1))
    in_ch, out_ch = x.shape[-1], params["w1"].shape[-1]
    if stride != 1 or in_ch != out_ch:
        identity = _ref_bn(_ref_conv(x, params["ws"], stride, 0, conv_dtype),
                           params["gs"], params["bs"])
    else:
        identity = x
    out = jax.nn.relu(_ref_bn(_ref_conv(x, params["w1"], stride, 1, conv_dtype),
                              params["g1"], params["b1"]))
    out = _ref_bn(_ref_conv(out, params["w2"], 1, 1, conv_dtype), params["g2"], params["b2"])
    out = jax.nn.relu(out + identity)
    return jnp.transpose(out, (0, 3, 1, 2))


if __name__ == "__main__":
    N, Cin, H, W = 2, 4, 16, 16
    Cout = 8          # Cin != Cout -> shortcut = conv1x1 + BN, as in the PyTorch module
    stride = 1

    key = jax.random.PRNGKey(0)
    keys = jax.random.split(key, 8)
    x = jax.random.normal(keys[0], (N, Cin, H, W), jnp.float32)

    params = dict(
        w1=0.1 * jax.random.normal(keys[1], (3, 3, Cin, Cout), jnp.float32),
        g1=1.0 + 0.1 * jax.random.normal(keys[2], (Cout,), jnp.float32),
        b1=0.1 * jax.random.normal(keys[3], (Cout,), jnp.float32),
        w2=0.1 * jax.random.normal(keys[4], (3, 3, Cout, Cout), jnp.float32),
        g2=1.0 + 0.1 * jax.random.normal(keys[5], (Cout,), jnp.float32),
        b2=0.1 * jax.random.normal(keys[6], (Cout,), jnp.float32),
        ws=0.1 * jax.random.normal(keys[7], (1, 1, Cin, Cout), jnp.float32),
        gs=jnp.ones((Cout,), jnp.float32),
        bs=jnp.zeros((Cout,), jnp.float32),
    )

    fwd = make_resblock_forward(params, (N, Cin, H, W), stride=stride)
    out = jax.block_until_ready(fwd(x))
    assert out.shape == (N, Cout, H // stride, W // stride), out.shape

    # Tight check vs. a reference using the same numerics contract (bf16 conv operands,
    # f32 accumulation / BN), and a looser check vs. the full-f32 module reference.
    ref_match = resblock_ref(x, params, stride=stride, conv_dtype=jnp.bfloat16)
    ref_full = resblock_ref(x, params, stride=stride, conv_dtype=jnp.float32)
    err_m = float(jnp.max(jnp.abs(out - ref_match)))
    err_f = float(jnp.max(jnp.abs(out - ref_full)))
    if not jnp.allclose(out, ref_match, atol=5e-3, rtol=5e-3):
        raise AssertionError(f"mismatch vs bf16-operand reference: max abs err = {err_m}")
    if not jnp.allclose(out, ref_full, atol=5e-2, rtol=5e-2):
        raise AssertionError(f"mismatch vs f32 reference: max abs err = {err_f}")
    print("KERNEL_OK")
</pallas_src>

<mosaic_0001>
module attributes {stable_mosaic.version = 11 : i64} {
  func.func @kernel(%arg0: i32, %arg1: memref<32x128xbf16, #tpu.memory_space<vmem>>, %arg2: memref<3x128x128xbf16, #tpu.memory_space<vmem>>, %arg3: memref<3x128x128xbf16, #tpu.memory_space<vmem>>, %arg4: memref<3x32x1xf32, #tpu.memory_space<vmem>>, %arg5: memref<1x8xf32, #tpu.memory_space<vmem>>, %arg6: memref<1x8xf32, #tpu.memory_space<vmem>>, %arg7: memref<1x8xf32, #tpu.memory_space<vmem>>, %arg8: memref<1x8xf32, #tpu.memory_space<vmem>>, %arg9: memref<128x8xf32, #tpu.memory_space<vmem>>, %arg10: memref<8x128xf32, #tpu.memory_space<vmem>>, %arg11: memref<128x128xbf16, #tpu.memory_space<vmem>>, %arg12: memref<1x8xf32, #tpu.memory_space<vmem>>, %arg13: memref<1x8xf32, #tpu.memory_space<vmem>>, %arg14: memref<32x128xf32, #tpu.memory_space<vmem>>, %arg15: memref<34x128xf32, #tpu.memory_space<vmem>>) attributes {dimension_semantics = [#tpu.dimension_semantics<arbitrary>], iteration_bounds = array<i64: 1>, scalar_prefetch = 0 : i64, scratch_operands = 1 : i64, tpu.core_type = #tpu.core_type<tc>, window_params = [{pipeline_mode = #tpu.pipeline_mode<synchronous>, transform_indices = @transform_0, window_bounds = array<i64: 32, 128>}, {pipeline_mode = #tpu.pipeline_mode<synchronous>, transform_indices = @transform_1, window_bounds = array<i64: 3, 128, 128>}, {pipeline_mode = #tpu.pipeline_mode<synchronous>, transform_indices = @transform_2, window_bounds = array<i64: 3, 128, 128>}, {pipeline_mode = #tpu.pipeline_mode<synchronous>, transform_indices = @transform_3, window_bounds = array<i64: 3, 32, 1>}, {pipeline_mode = #tpu.pipeline_mode<synchronous>, transform_indices = @transform_4, window_bounds = array<i64: 1, 8>}, {pipeline_mode = #tpu.pipeline_mode<synchronous>, transform_indices = @transform_5, window_bounds = array<i64: 1, 8>}, {pipeline_mode = #tpu.pipeline_mode<synchronous>, transform_indices = @transform_6, window_bounds = array<i64: 1, 8>}, {pipeline_mode = #tpu.pipeline_mode<synchronous>, transform_indices = @transform_7, window_bounds = array<i64: 1, 8>}, {pipeline_mode = #tpu.pipeline_mode<synchronous>, transform_indices = @transform_8, window_bounds = array<i64: 128, 8>}, {pipeline_mode = #tpu.pipeline_mode<synchronous>, transform_indices = @transform_9, window_bounds = array<i64: 8, 128>}, {pipeline_mode = #tpu.pipeline_mode<synchronous>, transform_indices = @transform_10, window_bounds = array<i64: 128, 128>}, {pipeline_mode = #tpu.pipeline_mode<synchronous>, transform_indices = @transform_11, window_bounds = array<i64: 1, 8>}, {pipeline_mode = #tpu.pipeline_mode<synchronous>, transform_indices = @transform_12, window_bounds = array<i64: 1, 8>}, {pipeline_mode = #tpu.pipeline_mode<synchronous>, transform_indices = @transform_13, window_bounds = array<i64: 32, 128>}]} {
    %c0 = arith.constant 0 : index
    %c0_0 = arith.constant 0 : index
    %0 = vector.load %arg9[%c0, %c0_0] : memref<128x8xf32, #tpu.memory_space<vmem>>, vector<128x8xf32>
    %c0_1 = arith.constant 0 : index
    %c0_2 = arith.constant 0 : index
    %1 = vector.load %arg10[%c0_1, %c0_2] : memref<8x128xf32, #tpu.memory_space<vmem>>, vector<8x128xf32>
    %2 = tpu.iota {dimensions = array<i32: 0>} : vector<2x1xi32>
    %c0_3 = arith.constant 0 : index
    %c0_4 = arith.constant 0 : index
    %3 = vector.load %arg1[%c0_3, %c0_4] : memref<32x128xbf16, #tpu.memory_space<vmem>>, vector<32x128xbf16>
    %cst = arith.constant 0.000000e+00 : f32
    %4 = vector.broadcast %cst : f32 to vector<34x128xf32>
    %c0_5 = arith.constant 0 : index
    %c0_6 = arith.constant 0 : index
    %5 = vector.load %arg15[%c0_5, %c0_6] : memref<34x128xf32, #tpu.memory_space<vmem>>, vector<34x128xf32>
    tpu.vector_store %arg15[%c0_5, %c0_6], %4 {strides = array<i32>} : memref<34x128xf32, #tpu.memory_space<vmem>>, vector<34x128xf32>,
    %c1 = arith.constant 1 : index
    %c0_7 = arith.constant 0 : index
    %6 = vector.load %arg15[%c1, %c0_7] : memref<34x128xf32, #tpu.memory_space<vmem>>, vector<32x128xf32>
    %c1_8 = arith.constant 1 : index
    %c0_9 = arith.constant 0 : index
    %c0_10 = arith.constant 0 : index
    %7 = vector.load %arg2[%c1_8, %c0_9, %c0_10] : memref<3x128x128xbf16, #tpu.memory_space<vmem>>, vector<1x128x128xbf16>
    %8 = vector.shape_cast %7 : vector<1x128x128xbf16> to vector<128x128xbf16>
    %cst_11 = arith.constant dense<0.000000e+00> : vector<32x128xf32>
    %9 = tpu.matmul %3, %8, %cst_11 {dimension_numbers = #tpu.dot_dimension_numbers<[1], [0], [0], [1], [0, 0, 1, 1], [], []>} : vector<32x128xbf16>, vector<128x128xbf16>, vector<32x128xf32> -> vector<32x128xf32>
    %10 = arith.addf %6, %9 : vector<32x128xf32>
    %c1_12 = arith.constant 1 : index
    %c0_13 = arith.constant 0 : index
    %11 = vector.load %arg15[%c1_12, %c0_13] : memref<34x128xf32, #tpu.memory_space<vmem>>, vector<32x128xf32>
    tpu.vector_store %arg15[%c1_12, %c0_13], %10 {strides = array<i32>} : memref<34x128xf32, #tpu.memory_space<vmem>>, vector<32x128xf32>,
    %c2 = arith.constant 2 : index
    %c0_14 = arith.constant 0 : index
    %12 = vector.load %arg15[%c2, %c0_14] : memref<34x128xf32, #tpu.memory_space<vmem>>, vector<32x128xf32>
    %c0_15 = arith.constant 0 : index
    %c0_16 = arith.constant 0 : index
    %c0_17 = arith.constant 0 : index
    %13 = vector.load %arg4[%c0_15, %c0_16, %c0_17] : memref<3x32x1xf32, #tpu.memory_space<vmem>>, vector<1x32x1xf32>
    %14 = vector.shape_cast %13 : vector<1x32x1xf32> to vector<32x1xf32>
    %c0_18 = arith.constant 0 : index
    %c0_19 = arith.constant 0 : index
    %c0_20 = arith.constant 0 : index
    %15 = vector.load %arg2[%c0_18, %c0_19, %c0_20] : memref<3x128x128xbf16, #tpu.memory_space<vmem>>, vector<1x128x128xbf16>
    %16 = vector.shape_cast %15 : vector<1x128x128xbf16> to vector<128x128xbf16>
    %cst_21 = arith.constant dense<0.000000e+00> : vector<32x128xf32>
    %17 = tpu.matmul %3, %16, %cst_21 {dimension_numbers = #tpu.dot_dimension_numbers<[1], [0], [0], [1], [0, 0, 1, 1], [], []>} : vector<32x128xbf16>, vector<128x128xbf16>, vector<32x128xf32> -> vector<32x128xf32>
    %18 = vector.broadcast %14 : vector<32x1xf32> to vector<32x128xf32>
    %19 = arith.mulf %18, %17 : vector<32x128xf32>
    %20 = arith.addf %12, %19 : vector<32x128xf32>
    %c2_22 = arith.constant 2 : index
    %c0_23 = arith.constant 0 : index
    %21 = vector.load %arg15[%c2_22, %c0_23] : memref<34x128xf32, #tpu.memory_space<vmem>>, vector<32x128xf32>
    tpu.vector_store %arg15[%c2_22, %c0_23], %20 {strides = array<i32>} : memref<34x128xf32, #tpu.memory_space<vmem>>, vector<32x128xf32>,
    %c0_24 = arith.constant 0 : index
    %c0_25 = arith.constant 0 : index
    %22 = vector.load %arg15[%c0_24, %c0_25] : memref<34x128xf32, #tpu.memory_space<vmem>>, vector<32x128xf32>
    %c2_26 = arith.constant 2 : index
    %c0_27 = arith.constant 0 : index
    %c0_28 = arith.constant 0 : index
    %23 = vector.load %arg4[%c2_26, %c0_27, %c0_28] : memref<3x32x1xf32, #tpu.memory_space<vmem>>, vector<1x32x1xf32>
    %24 = vector.shape_cast %23 : vector<1x32x1xf32> to vector<32x1xf32>
    %c2_29 = arith.constant 2 : index
    %c0_30 = arith.constant 0 : index
    %c0_31 = arith.constant 0 : index
    %25 = vector.load %arg2[%c2_29, %c0_30, %c0_31] : memref<3x128x128xbf16, #tpu.memory_space<vmem>>, vector<1x128x128xbf16>
    %26 = vector.shape_cast %25 : vector<1x128x128xbf16> to vector<128x128xbf16>
    %cst_32 = arith.constant dense<0.000000e+00> : vector<32x128xf32>
    %27 = tpu.matmul %3, %26, %cst_32 {dimension_numbers = #tpu.dot_dimension_numbers<[1], [0], [0], [1], [0, 0, 1, 1], [], []>} : vector<32x128xbf16>, vector<128x128xbf16>, vector<32x128xf32> -> vector<32x128xf32>
    %28 = vector.broadcast %24 : vector<32x1xf32> to vector<32x128xf32>
    %29 = arith.mulf %28, %27 : vector<32x128xf32>
    %30 = arith.addf %22, %29 : vector<32x128xf32>
    %c0_33 = arith.constant 0 : index
    %c0_34 = arith.constant 0 : index
    %31 = vector.load %arg15[%c0_33, %c0_34] : memref<34x128xf32, #tpu.memory_space<vmem>>, vector<32x128xf32>
    tpu.vector_store %arg15[%c0_33, %c0_34], %30 {strides = array<i32>} : memref<34x128xf32, #tpu.memory_space<vmem>>, vector<32x128xf32>,
    %c1_35 = arith.constant 1 : index
    %c0_36 = arith.constant 0 : index
    %32 = vector.load %arg15[%c1_35, %c0_36] : memref<34x128xf32, #tpu.memory_space<vmem>>, vector<32x128xf32>
    %cst_37 = arith.constant dense<0.000000e+00> : vector<128xf32>
    %33 = vector.multi_reduction <add>, %32, %cst_37 [0] : vector<32x128xf32> to vector<128xf32>
    %34 = vector.shape_cast %33 : vector<128xf32> to vector<1x128xf32>
    %35 = arith.mulf %32, %32 : vector<32x128xf32>
    %cst_38 = arith.constant dense<0.000000e+00> : vector<128xf32>
    %36 = vector.multi_reduction <add>, %35, %cst_38 [0] : vector<32x128xf32> to vector<128xf32>
    %37 = vector.shape_cast %36 : vector<128xf32> to vector<1x128xf32>
    %c0_i32 = arith.constant 0 : i32
    %38 = vector.broadcast %c0_i32 : i32 to vector<2x1xi32>
    %39 = arith.cmpi eq, %2, %38 : vector<2x1xi32>
    %40 = vector.shape_cast %39 : vector<2x1xi1> to vector<2x1xi1>
    %41 = vector.broadcast %40 : vector<2x1xi1> to vector<2x128xi1>
    %42 = vector.shape_cast %34 : vector<1x128xf32> to vector<1x128xf32>
    %43 = vector.broadcast %42 : vector<1x128xf32> to vector<2x128xf32>
    %44 = vector.shape_cast %37 : vector<1x128xf32> to vector<1x128xf32>
    %45 = vector.broadcast %44 : vector<1x128xf32> to vector<2x128xf32>
    %46 = arith.select %41, %43, %45 : vector<2x128xi1>, vector<2x128xf32>
    %cst_39 = arith.constant dense<0.000000e+00> : vector<2x8xf32>
    %47 = tpu.matmul %46, %0, %cst_39 {dimension_numbers = #tpu.dot_dimension_numbers<[1], [0], [0], [1], [0, 0, 1, 1], [], []>} : vector<2x128xf32>, vector<128x8xf32>, vector<2x8xf32> -> vector<2x8xf32>
    %cst_40 = arith.constant 0.001953125 : f32
    %48 = vector.broadcast %cst_40 : f32 to vector<2x8xf32>
    %49 = arith.mulf %47, %48 : vector<2x8xf32>
    %50 = vector.extract_strided_slice %49 {offsets = [0, 0], sizes = [1, 8], strides = [1, 1]} : vector<2x8xf32> to vector<1x8xf32>
    %51 = vector.extract_strided_slice %49 {offsets = [1, 0], sizes = [1, 8], strides = [1, 1]} : vector<2x8xf32> to vector<1x8xf32>
    %52 = arith.mulf %50, %50 : vector<1x8xf32>
    %53 = arith.subf %51, %52 : vector<1x8xf32>
    %cst_41 = arith.constant 0.000000e+00 : f32
    %54 = vector.broadcast %cst_41 : f32 to vector<1x8xf32>
    %55 = arith.maximumf %53, %54 : vector<1x8xf32>
    %c0_42 = arith.constant 0 : index
    %c0_43 = arith.constant 0 : index
    %56 = vector.load %arg5[%c0_42, %c0_43] : memref<1x8xf32, #tpu.memory_space<vmem>>, vector<1x8xf32>
    %cst_44 = arith.constant 9.99999974E-6 : f32
    %57 = vector.broadcast %cst_44 : f32 to vector<1x8xf32>
    %58 = arith.addf %55, %57 : vector<1x8xf32>
    %59 = math.rsqrt %58 : vector<1x8xf32>
    %60 = arith.mulf %56, %59 : vector<1x8xf32>
    %c0_45 = arith.constant 0 : index
    %c0_46 = arith.constant 0 : index
    %61 = vector.load %arg6[%c0_45, %c0_46] : memref<1x8xf32, #tpu.memory_space<vmem>>, vector<1x8xf32>
    %62 = arith.mulf %50, %60 : vector<1x8xf32>
    %63 = arith.subf %61, %62 : vector<1x8xf32>
    %c0_i32_47 = arith.constant 0 : i32
    %64 = vector.broadcast %c0_i32_47 : i32 to vector<2x1xi32>
    %65 = arith.cmpi eq, %2, %64 : vector<2x1xi32>
    %66 = vector.shape_cast %65 : vector<2x1xi1> to vector<2x1xi1>
    %67 = vector.broadcast %66 : vector<2x1xi1> to vector<2x8xi1>
    %68 = vector.shape_cast %60 : vector<1x8xf32> to vector<1x8xf32>
    %69 = vector.broadcast %68 : vector<1x8xf32> to vector<2x8xf32>
    %70 = vector.shape_cast %63 : vector<1x8xf32> to vector<1x8xf32>
    %71 = vector.broadcast %70 : vector<1x8xf32> to vector<2x8xf32>
    %72 = arith.select %67, %69, %71 : vector<2x8xi1>, vector<2x8xf32>
    %cst_48 = arith.constant dense<0.000000e+00> : vector<2x128xf32>
    %73 = tpu.matmul %72, %1, %cst_48 {dimension_numbers = #tpu.dot_dimension_numbers<[1], [0], [0], [1], [0, 0, 1, 1], [], []>} : vector<2x8xf32>, vector<8x128xf32>, vector<2x128xf32> -> vector<2x128xf32>
    %74 = vector.extract_strided_slice %73 {offsets = [0, 0], sizes = [1, 128], strides = [1, 1]} : vector<2x128xf32> to vector<1x128xf32>
    %75 = vector.broadcast %74 : vector<1x128xf32> to vector<32x128xf32>
    %76 = arith.mulf %32, %75 : vector<32x128xf32>
    %77 = vector.extract_strided_slice %73 {offsets = [1, 0], sizes = [1, 128], strides = [1, 1]} : vector<2x128xf32> to vector<1x128xf32>
    %78 = vector.broadcast %77 : vector<1x128xf32> to vector<32x128xf32>
    %79 = arith.addf %76, %78 : vector<32x128xf32>
    %cst_49 = arith.constant 0.000000e+00 : f32
    %80 = vector.broadcast %cst_49 : f32 to vector<32x128xf32>
    %81 = arith.maximumf %79, %80 : vector<32x128xf32>
    %82 = arith.truncf %81 : vector<32x128xf32> to vector<32x128xbf16>
    %cst_50 = arith.constant 0.000000e+00 : f32
    %83 = vector.broadcast %cst_50 : f32 to vector<34x128xf32>
    %c0_51 = arith.constant 0 : index
    %c0_52 = arith.constant 0 : index
    %84 = vector.load %arg15[%c0_51, %c0_52] : memref<34x128xf32, #tpu.memory_space<vmem>>, vector<34x128xf32>
    tpu.vector_store %arg15[%c0_51, %c0_52], %83 {strides = array<i32>} : memref<34x128xf32, #tpu.memory_space<vmem>>, vector<34x128xf32>,
    %c1_53 = arith.constant 1 : index
    %c0_54 = arith.constant 0 : index
    %85 = vector.load %arg15[%c1_53, %c0_54] : memref<34x128xf32, #tpu.memory_space<vmem>>, vector<32x128xf32>
    %c1_55 = arith.constant 1 : index
    %c0_56 = arith.constant 0 : index
    %c0_57 = arith.constant 0 : index
    %86 = vector.load %arg3[%c1_55, %c0_56, %c0_57] : memref<3x128x128xbf16, #tpu.memory_space<vmem>>, vector<1x128x128xbf16>
    %87 = vector.shape_cast %86 : vector<1x128x128xbf16> to vector<128x128xbf16>
    %cst_58 = arith.constant dense<0.000000e+00> : vector<32x128xf32>
    %88 = tpu.matmul %82, %87, %cst_58 {dimension_numbers = #tpu.dot_dimension_numbers<[1], [0], [0], [1], [0, 0, 1, 1], [], []>} : vector<32x128xbf16>, vector<128x128xbf16>, vector<32x128xf32> -> vector<32x128xf32>
    %89 = arith.addf %85, %88 : vector<32x128xf32>
    %c1_59 = arith.constant 1 : index
    %c0_60 = arith.constant 0 : index
    %90 = vector.load %arg15[%c1_59, %c0_60] : memref<34x128xf32, #tpu.memory_space<vmem>>, vector<32x128xf32>
    tpu.vector_store %arg15[%c1_59, %c0_60], %89 {strides = array<i32>} : memref<34x128xf32, #tpu.memory_space<vmem>>, vector<32x128xf32>,
    %c2_61 = arith.constant 2 : index
    %c0_62 = arith.constant 0 : index
    %91 = vector.load %arg15[%c2_61, %c0_62] : memref<34x128xf32, #tpu.memory_space<vmem>>, vector<32x128xf32>
    %c0_63 = arith.constant 0 : index
    %c0_64 = arith.constant 0 : index
    %c0_65 = arith.constant 0 : index
    %92 = vector.load %arg4[%c0_63, %c0_64, %c0_65] : memref<3x32x1xf32, #tpu.memory_space<vmem>>, vector<1x32x1xf32>
    %93 = vector.shape_cast %92 : vector<1x32x1xf32> to vector<32x1xf32>
    %c0_66 = arith.constant 0 : index
    %c0_67 = arith.constant 0 : index
    %c0_68 = arith.constant 0 : index
    %94 = vector.load %arg3[%c0_66, %c0_67, %c0_68] : memref<3x128x128xbf16, #tpu.memory_space<vmem>>, vector<1x128x128xbf16>
    %95 = vector.shape_cast %94 : vector<1x128x128xbf16> to vector<128x128xbf16>
    %cst_69 = arith.constant dense<0.000000e+00> : vector<32x128xf32>
    %96 = tpu.matmul %82, %95, %cst_69 {dimension_numbers = #tpu.dot_dimension_numbers<[1], [0], [0], [1], [0, 0, 1, 1], [], []>} : vector<32x128xbf16>, vector<128x128xbf16>, vector<32x128xf32> -> vector<32x128xf32>
    %97 = vector.broadcast %93 : vector<32x1xf32> to vector<32x128xf32>
    %98 = arith.mulf %97, %96 : vector<32x128xf32>
    %99 = arith.addf %91, %98 : vector<32x128xf32>
    %c2_70 = arith.constant 2 : index
    %c0_71 = arith.constant 0 : index
    %100 = vector.load %arg15[%c2_70, %c0_71] : memref<34x128xf32, #tpu.memory_space<vmem>>, vector<32x128xf32>
    tpu.vector_store %arg15[%c2_70, %c0_71], %99 {strides = array<i32>} : memref<34x128xf32, #tpu.memory_space<vmem>>, vector<32x128xf32>,
    %c0_72 = arith.constant 0 : index
    %c0_73 = arith.constant 0 : index
    %101 = vector.load %arg15[%c0_72, %c0_73] : memref<34x128xf32, #tpu.memory_space<vmem>>, vector<32x128xf32>
    %c2_74 = arith.constant 2 : index
    %c0_75 = arith.constant 0 : index
    %c0_76 = arith.constant 0 : index
    %102 = vector.load %arg4[%c2_74, %c0_75, %c0_76] : memref<3x32x1xf32, #tpu.memory_space<vmem>>, vector<1x32x1xf32>
    %103 = vector.shape_cast %102 : vector<1x32x1xf32> to vector<32x1xf32>
    %c2_77 = arith.constant 2 : index
    %c0_78 = arith.constant 0 : index
    %c0_79 = arith.constant 0 : index
    %104 = vector.load %arg3[%c2_77, %c0_78, %c0_79] : memref<3x128x128xbf16, #tpu.memory_space<vmem>>, vector<1x128x128xbf16>
    %105 = vector.shape_cast %104 : vector<1x128x128xbf16> to vector<128x128xbf16>
    %cst_80 = arith.constant dense<0.000000e+00> : vector<32x128xf32>
    %106 = tpu.matmul %82, %105, %cst_80 {dimension_numbers = #tpu.dot_dimension_numbers<[1], [0], [0], [1], [0, 0, 1, 1], [], []>} : vector<32x128xbf16>, vector<128x128xbf16>, vector<32x128xf32> -> vector<32x128xf32>
    %107 = vector.broadcast %103 : vector<32x1xf32> to vector<32x128xf32>
    %108 = arith.mulf %107, %106 : vector<32x128xf32>
    %109 = arith.addf %101, %108 : vector<32x128xf32>
    %c0_81 = arith.constant 0 : index
    %c0_82 = arith.constant 0 : index
    %110 = vector.load %arg15[%c0_81, %c0_82] : memref<34x128xf32, #tpu.memory_space<vmem>>, vector<32x128xf32>
    tpu.vector_store %arg15[%c0_81, %c0_82], %109 {strides = array<i32>} : memref<34x128xf32, #tpu.memory_space<vmem>>, vector<32x128xf32>,
    %c1_83 = arith.constant 1 : index
    %c0_84 = arith.constant 0 : index
    %111 = vector.load %arg15[%c1_83, %c0_84] : memref<34x128xf32, #tpu.memory_space<vmem>>, vector<32x128xf32>
    %cst_85 = arith.constant dense<0.000000e+00> : vector<128xf32>
    %112 = vector.multi_reduction <add>, %111, %cst_85 [0] : vector<32x128xf32> to vector<128xf32>
    %113 = vector.shape_cast %112 : vector<128xf32> to vector<1x128xf32>
    %114 = arith.mulf %111, %111 : vector<32x128xf32>
    %cst_86 = arith.constant dense<0.000000e+00> : vector<128xf32>
    %115 = vector.multi_reduction <add>, %114, %cst_86 [0] : vector<32x128xf32> to vector<128xf32>
    %116 = vector.shape_cast %115 : vector<128xf32> to vector<1x128xf32>
    %c0_i32_87 = arith.constant 0 : i32
    %117 = vector.broadcast %c0_i32_87 : i32 to vector<2x1xi32>
    %118 = arith.cmpi eq, %2, %117 : vector<2x1xi32>
    %119 = vector.shape_cast %118 : vector<2x1xi1> to vector<2x1xi1>
    %120 = vector.broadcast %119 : vector<2x1xi1> to vector<2x128xi1>
    %121 = vector.shape_cast %113 : vector<1x128xf32> to vector<1x128xf32>
    %122 = vector.broadcast %121 : vector<1x128xf32> to vector<2x128xf32>
    %123 = vector.shape_cast %116 : vector<1x128xf32> to vector<1x128xf32>
    %124 = vector.broadcast %123 : vector<1x128xf32> to vector<2x128xf32>
    %125 = arith.select %120, %122, %124 : vector<2x128xi1>, vector<2x128xf32>
    %cst_88 = arith.constant dense<0.000000e+00> : vector<2x8xf32>
    %126 = tpu.matmul %125, %0, %cst_88 {dimension_numbers = #tpu.dot_dimension_numbers<[1], [0], [0], [1], [0, 0, 1, 1], [], []>} : vector<2x128xf32>, vector<128x8xf32>, vector<2x8xf32> -> vector<2x8xf32>
    %cst_89 = arith.constant 0.001953125 : f32
    %127 = vector.broadcast %cst_89 : f32 to vector<2x8xf32>
    %128 = arith.mulf %126, %127 : vector<2x8xf32>
    %129 = vector.extract_strided_slice %128 {offsets = [0, 0], sizes = [1, 8], strides = [1, 1]} : vector<2x8xf32> to vector<1x8xf32>
    %130 = vector.extract_strided_slice %128 {offsets = [1, 0], sizes = [1, 8], strides = [1, 1]} : vector<2x8xf32> to vector<1x8xf32>
    %131 = arith.mulf %129, %129 : vector<1x8xf32>
    %132 = arith.subf %130, %131 : vector<1x8xf32>
    %cst_90 = arith.constant 0.000000e+00 : f32
    %133 = vector.broadcast %cst_90 : f32 to vector<1x8xf32>
    %134 = arith.maximumf %132, %133 : vector<1x8xf32>
    %c0_91 = arith.constant 0 : index
    %c0_92 = arith.constant 0 : index
    %135 = vector.load %arg7[%c0_91, %c0_92] : memref<1x8xf32, #tpu.memory_space<vmem>>, vector<1x8xf32>
    %cst_93 = arith.constant 9.99999974E-6 : f32
    %136 = vector.broadcast %cst_93 : f32 to vector<1x8xf32>
    %137 = arith.addf %134, %136 : vector<1x8xf32>
    %138 = math.rsqrt %137 : vector<1x8xf32>
    %139 = arith.mulf %135, %138 : vector<1x8xf32>
    %c0_94 = arith.constant 0 : index
    %c0_95 = arith.constant 0 : index
    %140 = vector.load %arg8[%c0_94, %c0_95] : memref<1x8xf32, #tpu.memory_space<vmem>>, vector<1x8xf32>
    %141 = arith.mulf %129, %139 : vector<1x8xf32>
    %142 = arith.subf %140, %141 : vector<1x8xf32>
    %c0_i32_96 = arith.constant 0 : i32
    %143 = vector.broadcast %c0_i32_96 : i32 to vector<2x1xi32>
    %144 = arith.cmpi eq, %2, %143 : vector<2x1xi32>
    %145 = vector.shape_cast %144 : vector<2x1xi1> to vector<2x1xi1>
    %146 = vector.broadcast %145 : vector<2x1xi1> to vector<2x8xi1>
    %147 = vector.shape_cast %139 : vector<1x8xf32> to vector<1x8xf32>
    %148 = vector.broadcast %147 : vector<1x8xf32> to vector<2x8xf32>
    %149 = vector.shape_cast %142 : vector<1x8xf32> to vector<1x8xf32>
    %150 = vector.broadcast %149 : vector<1x8xf32> to vector<2x8xf32>
    %151 = arith.select %146, %148, %150 : vector<2x8xi1>, vector<2x8xf32>
    %cst_97 = arith.constant dense<0.000000e+00> : vector<2x128xf32>
    %152 = tpu.matmul %151, %1, %cst_97 {dimension_numbers = #tpu.dot_dimension_numbers<[1], [0], [0], [1], [0, 0, 1, 1], [], []>} : vector<2x8xf32>, vector<8x128xf32>, vector<2x128xf32> -> vector<2x128xf32>
    %153 = vector.extract_strided_slice %152 {offsets = [0, 0], sizes = [1, 128], strides = [1, 1]} : vector<2x128xf32> to vector<1x128xf32>
    %154 = vector.broadcast %153 : vector<1x128xf32> to vector<32x128xf32>
    %155 = arith.mulf %111, %154 : vector<32x128xf32>
    %156 = vector.extract_strided_slice %152 {offsets = [1, 0], sizes = [1, 128], strides = [1, 1]} : vector<2x128xf32> to vector<1x128xf32>
    %157 = vector.broadcast %156 : vector<1x128xf32> to vector<32x128xf32>
    %158 = arith.addf %155, %157 : vector<32x128xf32>
    %c0_98 = arith.constant 0 : index
    %c0_99 = arith.constant 0 : index
    %159 = vector.load %arg11[%c0_98, %c0_99] : memref<128x128xbf16, #tpu.memory_space<vmem>>, vector<128x128xbf16>
    %cst_100 = arith.constant dense<0.000000e+00> : vector<32x128xf32>
    %160 = tpu.matmul %3, %159, %cst_100 {dimension_numbers = #tpu.dot_dimension_numbers<[1], [0], [0], [1], [0, 0, 1, 1], [], []>} : vector<32x128xbf16>, vector<128x128xbf16>, vector<32x128xf32> -> vector<32x128xf32>
    %cst_101 = arith.constant dense<0.000000e+00> : vector<128xf32>
    %161 = vector.multi_reduction <add>, %160, %cst_101 [0] : vector<32x128xf32> to vector<128xf32>
    %162 = vector.shape_cast %161 : vector<128xf32> to vector<1x128xf32>
    %163 = arith.mulf %160, %160 : vector<32x128xf32>
    %cst_102 = arith.constant dense<0.000000e+00> : vector<128xf32>
    %164 = vector.multi_reduction <add>, %163, %cst_102 [0] : vector<32x128xf32> to vector<128xf32>
    %165 = vector.shape_cast %164 : vector<128xf32> to vector<1x128xf32>
    %c0_i32_103 = arith.constant 0 : i32
    %166 = vector.broadcast %c0_i32_103 : i32 to vector<2x1xi32>
    %167 = arith.cmpi eq, %2, %166 : vector<2x1xi32>
    %168 = vector.shape_cast %167 : vector<2x1xi1> to vector<2x1xi1>
    %169 = vector.broadcast %168 : vector<2x1xi1> to vector<2x128xi1>
    %170 = vector.shape_cast %162 : vector<1x128xf32> to vector<1x128xf32>
    %171 = vector.broadcast %170 : vector<1x128xf32> to vector<2x128xf32>
    %172 = vector.shape_cast %165 : vector<1x128xf32> to vector<1x128xf32>
    %173 = vector.broadcast %172 : vector<1x128xf32> to vector<2x128xf32>
    %174 = arith.select %169, %171, %173 : vector<2x128xi1>, vector<2x128xf32>
    %cst_104 = arith.constant dense<0.000000e+00> : vector<2x8xf32>
    %175 = tpu.matmul %174, %0, %cst_104 {dimension_numbers = #tpu.dot_dimension_numbers<[1], [0], [0], [1], [0, 0, 1, 1], [], []>} : vector<2x128xf32>, vector<128x8xf32>, vector<2x8xf32> -> vector<2x8xf32>
    %cst_105 = arith.constant 0.001953125 : f32
    %176 = vector.broadcast %cst_105 : f32 to vector<2x8xf32>
    %177 = arith.mulf %175, %176 : vector<2x8xf32>
    %178 = vector.extract_strided_slice %177 {offsets = [0, 0], sizes = [1, 8], strides = [1, 1]} : vector<2x8xf32> to vector<1x8xf32>
    %179 = vector.extract_strided_slice %177 {offsets = [1, 0], sizes = [1, 8], strides = [1, 1]} : vector<2x8xf32> to vector<1x8xf32>
    %180 = arith.mulf %178, %178 : vector<1x8xf32>
    %181 = arith.subf %179, %180 : vector<1x8xf32>
    %cst_106 = arith.constant 0.000000e+00 : f32
    %182 = vector.broadcast %cst_106 : f32 to vector<1x8xf32>
    %183 = arith.maximumf %181, %182 : vector<1x8xf32>
    %c0_107 = arith.constant 0 : index
    %c0_108 = arith.constant 0 : index
    %184 = vector.load %arg12[%c0_107, %c0_108] : memref<1x8xf32, #tpu.memory_space<vmem>>, vector<1x8xf32>
    %cst_109 = arith.constant 9.99999974E-6 : f32
    %185 = vector.broadcast %cst_109 : f32 to vector<1x8xf32>
    %186 = arith.addf %183, %185 : vector<1x8xf32>
    %187 = math.rsqrt %186 : vector<1x8xf32>
    %188 = arith.mulf %184, %187 : vector<1x8xf32>
    %c0_110 = arith.constant 0 : index
    %c0_111 = arith.constant 0 : index
    %189 = vector.load %arg13[%c0_110, %c0_111] : memref<1x8xf32, #tpu.memory_space<vmem>>, vector<1x8xf32>
    %190 = arith.mulf %178, %188 : vector<1x8xf32>
    %191 = arith.subf %189, %190 : vector<1x8xf32>
    %c0_i32_112 = arith.constant 0 : i32
    %192 = vector.broadcast %c0_i32_112 : i32 to vector<2x1xi32>
    %193 = arith.cmpi eq, %2, %192 : vector<2x1xi32>
    %194 = vector.shape_cast %193 : vector<2x1xi1> to vector<2x1xi1>
    %195 = vector.broadcast %194 : vector<2x1xi1> to vector<2x8xi1>
    %196 = vector.shape_cast %188 : vector<1x8xf32> to vector<1x8xf32>
    %197 = vector.broadcast %196 : vector<1x8xf32> to vector<2x8xf32>
    %198 = vector.shape_cast %191 : vector<1x8xf32> to vector<1x8xf32>
    %199 = vector.broadcast %198 : vector<1x8xf32> to vector<2x8xf32>
    %200 = arith.select %195, %197, %199 : vector<2x8xi1>, vector<2x8xf32>
    %cst_113 = arith.constant dense<0.000000e+00> : vector<2x128xf32>
    %201 = tpu.matmul %200, %1, %cst_113 {dimension_numbers = #tpu.dot_dimension_numbers<[1], [0], [0], [1], [0, 0, 1, 1], [], []>} : vector<2x8xf32>, vector<8x128xf32>, vector<2x128xf32> -> vector<2x128xf32>
    %202 = vector.extract_strided_slice %201 {offsets = [0, 0], sizes = [1, 128], strides = [1, 1]} : vector<2x128xf32> to vector<1x128xf32>
    %203 = vector.broadcast %202 : vector<1x128xf32> to vector<32x128xf32>
    %204 = arith.mulf %160, %203 : vector<32x128xf32>
    %205 = vector.extract_strided_slice %201 {offsets = [1, 0], sizes = [1, 128], strides = [1, 1]} : vector<2x128xf32> to vector<1x128xf32>
    %206 = vector.broadcast %205 : vector<1x128xf32> to vector<32x128xf32>
    %207 = arith.addf %204, %206 : vector<32x128xf32>
    %208 = arith.addf %158, %207 : vector<32x128xf32>
    %cst_114 = arith.constant 0.000000e+00 : f32
    %209 = vector.broadcast %cst_114 : f32 to vector<32x128xf32>
    %210 = arith.maximumf %208, %209 : vector<32x128xf32>
    %c0_115 = arith.constant 0 : index
    %c0_116 = arith.constant 0 : index
    %211 = vector.load %arg14[%c0_115, %c0_116] : memref<32x128xf32, #tpu.memory_space<vmem>>, vector<32x128xf32>
    tpu.vector_store %arg14[%c0_115, %c0_116], %210 {strides = array<i32>} : memref<32x128xf32, #tpu.memory_space<vmem>>, vector<32x128xf32>,
    return
  }
  func.func @transform_0(%arg0: i32) -> (i32, i32) {
    %c0_i32 = arith.constant 0 : i32
    %c0_i32_0 = arith.constant 0 : i32
    %c0_i32_1 = arith.constant 0 : i32
    return %c0_i32, %c0_i32_0 : i32, i32
  }
  func.func @transform_1(%arg0: i32) -> (i32, i32, i32) {
    %c0_i32 = arith.constant 0 : i32
    %c0_i32_0 = arith.constant 0 : i32
    %c0_i32_1 = arith.constant 0 : i32
    %c0_i32_2 = arith.constant 0 : i32
    return %c0_i32, %c0_i32_0, %c0_i32_1 : i32, i32, i32
  }
  func.func @transform_2(%arg0: i32) -> (i32, i32, i32) {
    %c0_i32 = arith.constant 0 : i32
    %c0_i32_0 = arith.constant 0 : i32
    %c0_i32_1 = arith.constant 0 : i32
    %c0_i32_2 = arith.constant 0 : i32
    return %c0_i32, %c0_i32_0, %c0_i32_1 : i32, i32, i32
  }
  func.func @transform_3(%arg0: i32) -> (i32, i32, i32) {
    %c0_i32 = arith.constant 0 : i32
    %c0_i32_0 = arith.constant 0 : i32
    %c0_i32_1 = arith.constant 0 : i32
    %c0_i32_2 = arith.constant 0 : i32
    return %c0_i32, %c0_i32_0, %c0_i32_1 : i32, i32, i32
  }
  func.func @transform_4(%arg0: i32) -> (i32, i32) {
    %c0_i32 = arith.constant 0 : i32
    %c0_i32_0 = arith.constant 0 : i32
    %c0_i32_1 = arith.constant 0 : i32
    return %c0_i32, %c0_i32_0 : i32, i32
  }
  func.func @transform_5(%arg0: i32) -> (i32, i32) {
    %c0_i32 = arith.constant 0 : i32
    %c0_i32_0 = arith.constant 0 : i32
    %c0_i32_1 = arith.constant 0 : i32
    return %c0_i32, %c0_i32_0 : i32, i32
  }
  func.func @transform_6(%arg0: i32) -> (i32, i32) {
    %c0_i32 = arith.constant 0 : i32
    %c0_i32_0 = arith.constant 0 : i32
    %c0_i32_1 = arith.constant 0 : i32
    return %c0_i32, %c0_i32_0 : i32, i32
  }
  func.func @transform_7(%arg0: i32) -> (i32, i32) {
    %c0_i32 = arith.constant 0 : i32
    %c0_i32_0 = arith.constant 0 : i32
    %c0_i32_1 = arith.constant 0 : i32
    return %c0_i32, %c0_i32_0 : i32, i32
  }
  func.func @transform_8(%arg0: i32) -> (i32, i32) {
    %c0_i32 = arith.constant 0 : i32
    %c0_i32_0 = arith.constant 0 : i32
    %c0_i32_1 = arith.constant 0 : i32
    return %c0_i32, %c0_i32_0 : i32, i32
  }
  func.func @transform_9(%arg0: i32) -> (i32, i32) {
    %c0_i32 = arith.constant 0 : i32
    %c0_i32_0 = arith.constant 0 : i32
    %c0_i32_1 = arith.constant 0 : i32
    return %c0_i32, %c0_i32_0 : i32, i32
  }
  func.func @transform_10(%arg0: i32) -> (i32, i32) {
    %c0_i32 = arith.constant 0 : i32
    %c0_i32_0 = arith.constant 0 : i32
    %c0_i32_1 = arith.constant 0 : i32
    return %c0_i32, %c0_i32_0 : i32, i32
  }
  func.func @transform_11(%arg0: i32) -> (i32, i32) {
    %c0_i32 = arith.constant 0 : i32
    %c0_i32_0 = arith.constant 0 : i32
    %c0_i32_1 = arith.constant 0 : i32
    return %c0_i32, %c0_i32_0 : i32, i32
  }
  func.func @transform_12(%arg0: i32) -> (i32, i32) {
    %c0_i32 = arith.constant 0 : i32
    %c0_i32_0 = arith.constant 0 : i32
    %c0_i32_1 = arith.constant 0 : i32
    return %c0_i32, %c0_i32_0 : i32, i32
  }
  func.func @transform_13(%arg0: i32) -> (i32, i32) {
    %c0_i32 = arith.constant 0 : i32
    %c0_i32_0 = arith.constant 0 : i32
    %c0_i32_1 = arith.constant 0 : i32
    return %c0_i32, %c0_i32_0 : i32, i32
  }
}

</mosaic_0001>

<llo_original>
// kernel: forward.1
$region0: #{forward.1}
  #allocation0 [shape = 'u32[]', space=smem, size = 0x4, offset = 0x4, fixed_abs, tag = 'smem constant byte address 0x4 - core index']
  #allocation1 [shape = 'u32[144,128]{1,0:T(1,128)}', space=vmem, size = 0x12000, scoped, tag = 'internal scratch']
  #allocation2 [shape = 'f32[34,128]{1,0:T(8,128)}', space=vmem, size = 0x5000, scoped, tag = 'scratch operand']
  %s0 = inlined_call_operand.vmem [shape: bf16[32,128], index: 0, kind: input, shape index: {}]
  %s1 = inlined_call_operand.vmem [shape: bf16[3,128,128], index: 1, kind: input, shape index: {}]
  %s2 = inlined_call_operand.vmem [shape: bf16[3,128,128], index: 2, kind: input, shape index: {}]
  %s3 = inlined_call_operand.hbm [shape: f32[3,32,1], index: 3, kind: input, shape index: {}]
  %s4 = inlined_call_operand.hbm [shape: f32[1,8], index: 4, kind: input, shape index: {}]
  %s5 = inlined_call_operand.vmem [shape: f32[1,8], index: 5, kind: input, shape index: {}]
  %s6 = inlined_call_operand.vmem [shape: f32[1,8], index: 6, kind: input, shape index: {}]
  %s7 = inlined_call_operand.vmem [shape: f32[1,8], index: 7, kind: input, shape index: {}]
  %s8 = inlined_call_operand.vmem [shape: f32[128,8], index: 8, kind: input, shape index: {}]
  %s9 = inlined_call_operand.hbm [shape: f32[8,128], index: 9, kind: input, shape index: {}]
  %s10 = inlined_call_operand.hbm [shape: bf16[128,128], index: 10, kind: input, shape index: {}]
  %s11 = inlined_call_operand.vmem [shape: f32[1,8], index: 11, kind: input, shape index: {}]
  %s12 = inlined_call_operand.vmem [shape: f32[1,8], index: 12, kind: input, shape index: {}]
  %s13 = inlined_call_operand.vmem [shape: f32[32,128], index: 13, kind: output, shape index: {}]
  %s14 = sld [smem:[#allocation0]]
  $region78: #{forward.1} parent=0
    _
  %s16 = ssub.s32 1, %s14
  %s17 = scalar_select 0, %s16, %s14
  $region1: #{forward.1} parent=0
    #allocation3 [shape = 'u8[49152]{0}', space=vmem, size = 0xc000, scoped, tag = 'input window, operand 3, single buffered']
    #allocation4 [shape = 's32[1]{0}', space=sflag, size = 0x4, scoped, tag = 'scoped memory for forward.1']
    #allocation5 [shape = 'u8[512]{0}', space=vmem, size = 0x400, scoped, tag = 'input window, operand 4, single buffered']
    #allocation6 [shape = 's32[1]{0}', space=sflag, size = 0x4, scoped, tag = 'scoped memory for forward.1']
    #allocation7 [shape = 'u8[4096]{0}', space=vmem, size = 0x1000, scoped, tag = 'input window, operand 9, single buffered']
    #allocation8 [shape = 'u8[32768]{0}', space=vmem, size = 0x8000, scoped, tag = 'input window, operand 10, single buffered']
    #allocation9 [shape = 's32[1]{0}', space=sflag, size = 0x4, scoped, tag = 'scoped memory for forward.1']
    %18 = vsyncpa [#allocation4], 0
    %19 = vsyncpa [#allocation6], 0
    %20 = vsyncpa [#allocation9], 0
    // Predicated region
    $region2: #{forward.1} parent=1 // pred_check
      _
    $region3: #{forward.1} parent=1 // pred_check_branch
      %22 = sbr.rel (0) target = $region5
    $region4: #{forward.1} parent=1 // pred_region
      _
    $region5: #{forward.1} parent=1 // pred_fallthru
      _
    // Predicated region
    $region6: #{forward.1} parent=1 // pred_check
      _
    $region7: #{forward.1} parent=1 // pred_check_branch
      %24 = sbr.rel (0) target = $region9
    $region8: #{forward.1} parent=1 // pred_region
      _
    $region9: #{forward.1} parent=1 // pred_fallthru
      _
    // Predicated region
    $region10: #{forward.1} parent=1 // pred_check
      _
    $region11: #{forward.1} parent=1 // pred_check_branch
      %26 = sbr.rel (0) target = $region13
    $region12: #{forward.1} parent=1 // pred_region
      _
    $region13: #{forward.1} parent=1 // pred_fallthru
      _
    // Predicated region
    $region14: #{forward.1} parent=1 // pred_check
      _
    $region15: #{forward.1} parent=1 // pred_check_branch
      %28 = sbr.rel (0) target = $region17
    $region16: #{forward.1} parent=1 // pred_region
      %s30 = ssub.s32 1536, 1536
      %31 = vsyncadd [#allocation4], %s30
      %s32 = sshll.u32 [#allocation3], 4
      %s33 = int_to_ptr.vmem [resolvable:$true] %s32
      %38 = dma.hbm_to_vmem [thread:$0]  %s3, 1536, %s33, [#allocation4], 128, 128, 8
    $region17: #{forward.1} parent=1 // pred_fallthru
      _
    // Predicated region
    $region18: #{forward.1} parent=1 // pred_check
      _
    $region19: #{forward.1} parent=1 // pred_check_branch
      %40 = sbr.rel (0) target = $region21
    $region20: #{forward.1} parent=1 // pred_region
      %s42 = ssub.s32 16, 16
      %43 = vsyncadd [#allocation6], %s42
      %s45 = sshll.u32 [#allocation5], 4
      %s46 = int_to_ptr.vmem [resolvable:$true] %s45
      %48 = dma.hbm_to_vmem [thread:$0]  %s4, 16, %s46, [#allocation6]
    $region21: #{forward.1} parent=1 // pred_fallthru
      _
    // Predicated region
    $region22: #{forward.1} parent=1 // pred_check
      _
    $region23: #{forward.1} parent=1 // pred_check_branch
      %50 = sbr.rel (0) target = $region25
    $region24: #{forward.1} parent=1 // pred_region
      _
    $region25: #{forward.1} parent=1 // pred_fallthru
      _
    // Predicated region
    $region26: #{forward.1} parent=1 // pred_check
      _
    $region27: #{forward.1} parent=1 // pred_check_branch
      %52 = sbr.rel (0) target = $region29
    $region28: #{forward.1} parent=1 // pred_region
      _
    $region29: #{forward.1} parent=1 // pred_fallthru
      _
    // Predicated region
    $region30: #{forward.1} parent=1 // pred_check
      _
    $region31: #{forward.1} parent=1 // pred_check_branch
      %54 = sbr.rel (0) target = $region33
    $region32: #{forward.1} parent=1 // pred_region
      _
    $region33: #{forward.1} parent=1 // pred_fallthru
      _
    // Predicated region
    $region34: #{forward.1} parent=1 // pred_check
      _
    $region35: #{forward.1} parent=1 // pred_check_branch
      %56 = sbr.rel (0) target = $region37
    $region36: #{forward.1} parent=1 // pred_region
      _
    $region37: #{forward.1} parent=1 // pred_fallthru
      _
    // Predicated region
    $region38: #{forward.1} parent=1 // pred_check
      _
    $region39: #{forward.1} parent=1 // pred_check_branch
      %58 = sbr.rel (0) target = $region41
    $region40: #{forward.1} parent=1 // pred_region
      %s60 = ssub.s32 128, 128
      %61 = vsyncadd [#allocation6], %s60
      %s63 = sshll.u32 [#allocation7], 4
      %s64 = int_to_ptr.vmem [resolvable:$true] %s63
      %66 = dma.hbm_to_vmem [thread:$0]  %s9, 128, %s64, [#allocation6]
    $region41: #{forward.1} parent=1 // pred_fallthru
      _
    // Predicated region
    $region42: #{forward.1} parent=1 // pred_check
      _
    $region43: #{forward.1} parent=1 // pred_check_branch
      %68 = sbr.rel (0) target = $region45
    $region44: #{forward.1} parent=1 // pred_region
      %s70 = ssub.s32 1024, 1024
      %71 = vsyncadd [#allocation9], %s70
      %s72 = sshll.u32 [#allocation8], 4
      %s73 = int_to_ptr.vmem [resolvable:$true] %s72
      %78 = dma.hbm_to_vmem [thread:$0]  %s10, 1024, %s73, [#allocation9], 64, 64, 4
    $region45: #{forward.1} parent=1 // pred_fallthru
      _
    // Predicated region
    $region46: #{forward.1} parent=1 // pred_check
      _
    $region47: #{forward.1} parent=1 // pred_check_branch
      %80 = sbr.rel (0) target = $region49
    $region48: #{forward.1} parent=1 // pred_region
      _
    $region49: #{forward.1} parent=1 // pred_fallthru
      _
    // Predicated region
    $region50: #{forward.1} parent=1 // pred_check
      _
    $region51: #{forward.1} parent=1 // pred_check_branch
      %82 = sbr.rel (0) target = $region53
    $region52: #{forward.1} parent=1 // pred_region
      _
    $region53: #{forward.1} parent=1 // pred_fallthru
      _
    // Predicated region
    $region54: #{forward.1} parent=1 // pred_check
      _
    $region55: #{forward.1} parent=1 // pred_check_branch
      %84 = sbr.rel (0) target = $region57
    $region56: #{forward.1} parent=1 // pred_region
      %85 = dma.done [#allocation4], 1536
    $region57: #{forward.1} parent=1 // pred_fallthru
      _
    // Predicated region
    $region58: #{forward.1} parent=1 // pred_check
      _
    $region59: #{forward.1} parent=1 // pred_check_branch
      %87 = sbr.rel (0) target = $region61
    $region60: #{forward.1} parent=1 // pred_region
      %88 = dma.done [#allocation6], 16
    $region61: #{forward.1} parent=1 // pred_fallthru
      _
    // Predicated region
    $region62: #{forward.1} parent=1 // pred_check
      _
    $region63: #{forward.1} parent=1 // pred_check_branch
      %90 = sbr.rel (0) target = $region65
    $region64: #{forward.1} parent=1 // pred_region
      %91 = dma.done [#allocation6], 128
    $region65: #{forward.1} parent=1 // pred_fallthru
      _
    // Predicated region
    $region66: #{forward.1} parent=1 // pred_check
      _
    $region67: #{forward.1} parent=1 // pred_check_branch
      %93 = sbr.rel (0) target = $region69
    $region68: #{forward.1} parent=1 // pred_region
      %94 = dma.done [#allocation9], 1024
    $region69: #{forward.1} parent=1 // pred_fallthru
      _
    %v96 = vld [vmem:[%s8] sm:$0xff]
    %v97 = vld [vmem:[%s8 + $0x8] sm:$0xff]
    %v98 = vld [vmem:[%s8 + $0x10] sm:$0xff]
    %v99 = vld [vmem:[%s8 + $0x18] sm:$0xff]
    %v100 = vld [vmem:[%s8 + $0x20] sm:$0xff]
    %v101 = vld [vmem:[%s8 + $0x28] sm:$0xff]
    %v102 = vld [vmem:[%s8 + $0x30] sm:$0xff]
    %v103 = vld [vmem:[%s8 + $0x38] sm:$0xff]
    %v104 = vld [vmem:[%s8 + $0x40] sm:$0xff]
    %v105 = vld [vmem:[%s8 + $0x48] sm:$0xff]
    %v106 = vld [vmem:[%s8 + $0x50] sm:$0xff]
    %v107 = vld [vmem:[%s8 + $0x58] sm:$0xff]
    %v108 = vld [vmem:[%s8 + $0x60] sm:$0xff]
    %v109 = vld [vmem:[%s8 + $0x68] sm:$0xff]
    %v110 = vld [vmem:[%s8 + $0x70] sm:$0xff]
    %v111 = vld [vmem:[%s8 + $0x78] sm:$0xff]
    %v112 = vld [vmem:[#allocation7] sm:$0xff]
    %v113 = vlaneseq
    %v114 = vshrl.u32 %v113, 7
    %v115 = vld [vmem:[%s0] sm:$0xf]
    %v116 = vld [vmem:[%s0 + $0x4] sm:$0xf]
    %v117 = vld [vmem:[%s0 + $0x8] sm:$0xf]
    %v118 = vld [vmem:[%s0 + $0xc] sm:$0xf]
    %119 = vst [vmem:[#allocation2] sm:$0xff] 0.0
    %120 = vst [vmem:[#allocation2 + $0x8] sm:$0xff] 0.0
    %121 = vst [vmem:[#allocation2 + $0x10] sm:$0xff] 0.0
    %122 = vst [vmem:[#allocation2 + $0x18] sm:$0xff] 0.0
    %123 = vst [vmem:[#allocation2 + $0x20] sm:$0x3] 0.0
    %v124 = vld [vmem:[#allocation2 + $0x1] sm:$0xff]
    %v125 = vld [vmem:[#allocation2 + $0x9] sm:$0xff]
    %v126 = vld [vmem:[#allocation2 + $0x11] sm:$0xff]
    %v127 = vld [vmem:[#allocation2 + $0x19] sm:$0xff]
    %s128 = scalar_lea.vmem %s1, 64
    %v129 = vld [vmem:[%s128] sm:$0xf]
    %v130 = vld [vmem:[%s128 + $0x4] sm:$0xf]
    %v131 = vld [vmem:[%s128 + $0x8] sm:$0xf]
    %v132 = vld [vmem:[%s128 + $0xc] sm:$0xf]
    %v133 = vld [vmem:[%s128 + $0x10] sm:$0xf]
    %v134 = vld [vmem:[%s128 + $0x14] sm:$0xf]
    %v135 = vld [vmem:[%s128 + $0x18] sm:$0xf]
    %v136 = vld [vmem:[%s128 + $0x1c] sm:$0xf]
    %v137 = vld [vmem:[%s128 + $0x20] sm:$0xf]
    %v138 = vld [vmem:[%s128 + $0x24] sm:$0xf]
    %v139 = vld [vmem:[%s128 + $0x28] sm:$0xf]
    %v140 = vld [vmem:[%s128 + $0x2c] sm:$0xf]
    %v141 = vld [vmem:[%s128 + $0x30] sm:$0xf]
    %v142 = vld [vmem:[%s128 + $0x34] sm:$0xf]
    %v143 = vld [vmem:[%s128 + $0x38] sm:$0xf]
    %v144 = vld [vmem:[%s128 + $0x3c] sm:$0xf]
    %v149 = vunpack.c.l.b16 %v115
    %v150 = vunpack.c.l.b16 %v116
    %v151 = vunpack.c.l.b16 %v117
    %v152 = vunpack.c.l.b16 %v118
    %v153 = vpack.c.b16 %v150, %v149
    %v154 = vpack.c.b16 %v152, %v151
    %v173 = vunpack.c.l.b16 %v129
    %v174 = vunpack.c.l.b16 %v130
    %v175 = vunpack.c.l.b16 %v131
    %v176 = vunpack.c.l.b16 %v132
    %v177 = vunpack.c.l.b16 %v133
    %v178 = vunpack.c.l.b16 %v134
    %v179 = vunpack.c.l.b16 %v135
    %v180 = vunpack.c.l.b16 %v136
    %v181 = vunpack.c.l.b16 %v137
    %v182 = vunpack.c.l.b16 %v138
    %v183 = vunpack.c.l.b16 %v139
    %v184 = vunpack.c.l.b16 %v140
    %v185 = vunpack.c.l.b16 %v141
    %v186 = vunpack.c.l.b16 %v142
    %v187 = vunpack.c.l.b16 %v143
    %v188 = vunpack.c.l.b16 %v144
    %v189 = vpack.c.b16 %v174, %v173
    %v190 = vpack.c.b16 %v176, %v175
    %v191 = vpack.c.b16 %v178, %v177
    %v192 = vpack.c.b16 %v180, %v179
    %v193 = vpack.c.b16 %v182, %v181
    %v194 = vpack.c.b16 %v184, %v183
    %v195 = vpack.c.b16 %v186, %v185
    %v196 = vpack.c.b16 %v188, %v187
    %205 = vmatprep.subr.bf16.mxu0 0
    %206 = vmatpush1.bf16.msra.mxu0 %v196
    %207 = vmatprep.subr.bf16.mxu0 0
    %208 = vmatpush1.bf16.msra.mxu0 %v195
    %209 = vmatprep.subr.bf16.mxu0 0
    %210 = vmatpush1.bf16.msra.mxu0 %v194
    %211 = vmatprep.subr.bf16.mxu0 0
    %212 = vmatpush1.bf16.msra.mxu0 %v193
    %213 = vmatprep.subr.bf16.mxu0 0
    %214 = vmatpush1.bf16.msra.mxu0 %v192
    %215 = vmatprep.subr.bf16.mxu0 0
    %216 = vmatpush1.bf16.msra.mxu0 %v191
    %217 = vmatprep.subr.bf16.mxu0 0
    %218 = vmatpush1.bf16.msra.mxu0 %v190
    %219 = vmatprep.subr.bf16.mxu0 0
    %220 = vmatpush1.bf16.msra.mxu0 %v189
    %221 = vmatprep.subr.bf16.mxu0 0
    %222 = vmatpush2.bf16.msra.mxu0 0
    %223 = vmatprep.subr.bf16.mxu0 0
    %224 = vmatpush2.bf16.msra.mxu0 0
    %225 = vmatprep.subr.bf16.mxu0 0
    %226 = vmatpush2.bf16.msra.mxu0 0
    %227 = vmatprep.subr.bf16.mxu0 0
    %228 = vmatpush2.bf16.msra.mxu0 0
    %229 = vmatprep.subr.bf16.mxu0 0
    %230 = vmatpush2.bf16.msra.mxu0 0
    %231 = vmatprep.subr.bf16.mxu0 0
    %232 = vmatpush2.bf16.msra.mxu0 0
    %233 = vmatprep.subr.bf16.mxu0 0
    %234 = vmatpush2.bf16.msra.mxu0 0
    %235 = vmatprep.subr.bf16.mxu0 0
    %236 = vmatpush2.bf16.msra.mxu0 0
    %237 = vmatprep.mubr.bf16.mxu0 0
    %238 = vmatmul.mubr.bf16.gmra.mxu0 %v153
    %v239 = vpop.f32.mrf.mxu0
    %v240 = vadd.f32 0.0, %v239
    %v241 = vpop.f32.mrf.mxu0
    %v242 = vpop.f32.mrf.mxu0
    %v243 = vadd.f32 0.0, %v242
    %v244 = vpop.f32.mrf.mxu0
    %245 = vmatprep.mubr.bf16.mxu0 0
    %246 = vmatmul.mubr.bf16.gmra.mxu0 %v154
    %v247 = vpop.f32.mrf.mxu0
    %v248 = vadd.f32 0.0, %v247
    %v249 = vpop.f32.mrf.mxu0
    %v250 = vpop.f32.mrf.mxu0
    %v251 = vadd.f32 0.0, %v250
    %v252 = vpop.f32.mrf.mxu0
    %253 = vdwg.mxu0
    %v254 = vadd.f32 %v124, %v240
    %v255 = vadd.f32 %v125, %v243
    %v256 = vadd.f32 %v126, %v248
    %v257 = vadd.f32 %v127, %v251
    %258 = vst [vmem:[#allocation2 + $0x1] sm:$0xff] %v254
    %259 = vst [vmem:[#allocation2 + $0x9] sm:$0xff] %v255
    %260 = vst [vmem:[#allocation2 + $0x11] sm:$0xff] %v256
    %261 = vst [vmem:[#allocation2 + $0x19] sm:$0xff] %v257
    %v262 = vld [vmem:[#allocation2 + $0x2] sm:$0xff]
    %v263 = vld [vmem:[#allocation2 + $0xa] sm:$0xff]
    %v264 = vld [vmem:[#allocation2 + $0x12] sm:$0xff]
    %v265 = vld [vmem:[#allocation2 + $0x1a] sm:$0xff]
    %v266 = vld [vmem:[#allocation3] sm:$0xff]
    %v267 = vld [vmem:[#allocation3 + $0x8] sm:$0xff]
    %v268 = vld [vmem:[#allocation3 + $0x10] sm:$0xff]
    %v269 = vld [vmem:[#allocation3 + $0x18] sm:$0xff]
    %v270 = vld [vmem:[%s1] sm:$0xf]
    %v271 = vld [vmem:[%s1 + $0x4] sm:$0xf]
    %v272 = vld [vmem:[%s1 + $0x8] sm:$0xf]
    %v273 = vld [vmem:[%s1 + $0xc] sm:$0xf]
    %v274 = vld [vmem:[%s1 + $0x10] sm:$0xf]
    %v275 = vld [vmem:[%s1 + $0x14] sm:$0xf]
    %v276 = vld [vmem:[%s1 + $0x18] sm:$0xf]
    %v277 = vld [vmem:[%s1 + $0x1c] sm:$0xf]
    %v278 = vld [vmem:[%s1 + $0x20] sm:$0xf]
    %v279 = vld [vmem:[%s1 + $0x24] sm:$0xf]
    %v280 = vld [vmem:[%s1 + $0x28] sm:$0xf]
    %v281 = vld [vmem:[%s1 + $0x2c] sm:$0xf]
    %v282 = vld [vmem:[%s1 + $0x30] sm:$0xf]
    %v283 = vld [vmem:[%s1 + $0x34] sm:$0xf]
    %v284 = vld [vmem:[%s1 + $0x38] sm:$0xf]
    %v285 = vld [vmem:[%s1 + $0x3c] sm:$0xf]
    %v302 = vunpack.c.l.b16 %v270
    %v303 = vunpack.c.l.b16 %v271
    %v304 = vunpack.c.l.b16 %v272
    %v305 = vunpack.c.l.b16 %v273
    %v306 = vunpack.c.l.b16 %v274
    %v307 = vunpack.c.l.b16 %v275
    %v308 = vunpack.c.l.b16 %v276
    %v309 = vunpack.c.l.b16 %v277
    %v310 = vunpack.c.l.b16 %v278
    %v311 = vunpack.c.l.b16 %v279
    %v312 = vunpack.c.l.b16 %v280
    %v313 = vunpack.c.l.b16 %v281
    %v314 = vunpack.c.l.b16 %v282
    %v315 = vunpack.c.l.b16 %v283
    %v316 = vunpack.c.l.b16 %v284
    %v317 = vunpack.c.l.b16 %v285
    %v318 = vpack.c.b16 %v303, %v302
    %v319 = vpack.c.b16 %v305, %v304
    %v320 = vpack.c.b16 %v307, %v306
    %v321 = vpack.c.b16 %v309, %v308
    %v322 = vpack.c.b16 %v311, %v310
    %v323 = vpack.c.b16 %v313, %v312
    %v324 = vpack.c.b16 %v315, %v314
    %v325 = vpack.c.b16 %v317, %v316
    %334 = vmatprep.subr.bf16.mxu0 0
    %335 = vmatpush1.bf16.msra.mxu0 %v325
    %336 = vmatprep.subr.bf16.mxu0 0
    %337 = vmatpush1.bf16.msra.mxu0 %v324
    %338 = vmatprep.subr.bf16.mxu0 0
    %339 = vmatpush1.bf16.msra.mxu0 %v323
    %340 = vmatprep.subr.bf16.mxu0 0
    %341 = vmatpush1.bf16.msra.mxu0 %v322
    %342 = vmatprep.subr.bf16.mxu0 0
    %343 = vmatpush1.bf16.msra.mxu0 %v321
    %344 = vmatprep.subr.bf16.mxu0 0
    %345 = vmatpush1.bf16.msra.mxu0 %v320
    %346 = vmatprep.subr.bf16.mxu0 0
    %347 = vmatpush1.bf16.msra.mxu0 %v319
    %348 = vmatprep.subr.bf16.mxu0 0
    %349 = vmatpush1.bf16.msra.mxu0 %v318
    %350 = vmatprep.subr.bf16.mxu0 0
    %351 = vmatpush2.bf16.msra.mxu0 0
    %352 = vmatprep.subr.bf16.mxu0 0
    %353 = vmatpush2.bf16.msra.mxu0 0
    %354 = vmatprep.subr.bf16.mxu0 0
    %355 = vmatpush2.bf16.msra.mxu0 0
    %356 = vmatprep.subr.bf16.mxu0 0
    %357 = vmatpush2.bf16.msra.mxu0 0
    %358 = vmatprep.subr.bf16.mxu0 0
    %359 = vmatpush2.bf16.msra.mxu0 0
    %360 = vmatprep.subr.bf16.mxu0 0
    %361 = vmatpush2.bf16.msra.mxu0 0
    %362 = vmatprep.subr.bf16.mxu0 0
    %363 = vmatpush2.bf16.msra.mxu0 0
    %364 = vmatprep.subr.bf16.mxu0 0
    %365 = vmatpush2.bf16.msra.mxu0 0
    %366 = vmatprep.mubr.bf16.mxu0 0
    %367 = vmatmul.mubr.bf16.gmra.mxu0 %v153
    %v368 = vpop.f32.mrf.mxu0
    %v369 = vadd.f32 0.0, %v368
    %v370 = vpop.f32.mrf.mxu0
    %v371 = vpop.f32.mrf.mxu0
    %v372 = vadd.f32 0.0, %v371
    %v373 = vpop.f32.mrf.mxu0
    %374 = vmatprep.mubr.bf16.mxu0 0
    %375 = vmatmul.mubr.bf16.gmra.mxu0 %v154
    %v376 = vpop.f32.mrf.mxu0
    %v377 = vadd.f32 0.0, %v376
    %v378 = vpop.f32.mrf.mxu0
    %v379 = vpop.f32.mrf.mxu0
    %v380 = vadd.f32 0.0, %v379
    %v381 = vpop.f32.mrf.mxu0
    %382 = vdwg.mxu0
    %384 = vset.pattern.permute.xlu0 0
    %385 = vperm.xlu0 %384, %v266
    %v386 = vpop.permute.xlu0 %385
    %389 = vset.pattern.permute.xlu0 0
    %390 = vperm.xlu0 %389, %v267
    %v391 = vpop.permute.xlu0 %390
    %394 = vset.pattern.permute.xlu0 0
    %395 = vperm.xlu0 %394, %v268
    %v396 = vpop.permute.xlu0 %395
    %399 = vset.pattern.permute.xlu0 0
    %400 = vperm.xlu0 %399, %v269
    %v401 = vpop.permute.xlu0 %400
    %v403 = vmul.f32 %v386, %v369
    %v404 = vmul.f32 %v391, %v372
    %v405 = vmul.f32 %v396, %v377
    %v406 = vmul.f32 %v401, %v380
    %v407 = vadd.f32 %v262, %v403
    %v408 = vadd.f32 %v263, %v404
    %v409 = vadd.f32 %v264, %v405
    %v410 = vadd.f32 %v265, %v406
    %411 = vst [vmem:[#allocation2 + $0x2] sm:$0xff] %v407
    %412 = vst [vmem:[#allocation2 + $0xa] sm:$0xff] %v408
    %413 = vst [vmem:[#allocation2 + $0x12] sm:$0xff] %v409
    %414 = vst [vmem:[#allocation2 + $0x1a] sm:$0xff] %v410
    %v415 = vld [vmem:[#allocation2] sm:$0xff]
    %v416 = vld [vmem:[#allocation2 + $0x8] sm:$0xff]
    %v417 = vld [vmem:[#allocation2 + $0x10] sm:$0xff]
    %v418 = vld [vmem:[#allocation2 + $0x18] sm:$0xff]
    %s419 = scalar_lea.vmem [#allocation3], 64
    %v420 = vld [vmem:[%s419] sm:$0xff]
    %v421 = vld [vmem:[%s419 + $0x8] sm:$0xff]
    %v422 = vld [vmem:[%s419 + $0x10] sm:$0xff]
    %v423 = vld [vmem:[%s419 + $0x18] sm:$0xff]
    %s424 = scalar_lea.vmem %s1, 128
    %v425 = vld [vmem:[%s424] sm:$0xf]
    %v426 = vld [vmem:[%s424 + $0x4] sm:$0xf]
    %v427 = vld [vmem:[%s424 + $0x8] sm:$0xf]
    %v428 = vld [vmem:[%s424 + $0xc] sm:$0xf]
    %v429 = vld [vmem:[%s424 + $0x10] sm:$0xf]
    %v430 = vld [vmem:[%s424 + $0x14] sm:$0xf]
    %v431 = vld [vmem:[%s424 + $0x18] sm:$0xf]
    %v432 = vld [vmem:[%s424 + $0x1c] sm:$0xf]
    %v433 = vld [vmem:[%s424 + $0x20] sm:$0xf]
    %v434 = vld [vmem:[%s424 + $0x24] sm:$0xf]
    %v435 = vld [vmem:[%s424 + $0x28] sm:$0xf]
    %v436 = vld [vmem:[%s424 + $0x2c] sm:$0xf]
    %v437 = vld [vmem:[%s424 + $0x30] sm:$0xf]
    %v438 = vld [vmem:[%s424 + $0x34] sm:$0xf]
    %v439 = vld [vmem:[%s424 + $0x38] sm:$0xf]
    %v440 = vld [vmem:[%s424 + $0x3c] sm:$0xf]
    %v457 = vunpack.c.l.b16 %v425
    %v458 = vunpack.c.l.b16 %v426
    %v459 = vunpack.c.l.b16 %v427
    %v460 = vunpack.c.l.b16 %v428
    %v461 = vunpack.c.l.b16 %v429
    %v462 = vunpack.c.l.b16 %v430
    %v463 = vunpack.c.l.b16 %v431
    %v464 = vunpack.c.l.b16 %v432
    %v465 = vunpack.c.l.b16 %v433
    %v466 = vunpack.c.l.b16 %v434
    %v467 = vunpack.c.l.b16 %v435
    %v468 = vunpack.c.l.b16 %v436
    %v469 = vunpack.c.l.b16 %v437
    %v470 = vunpack.c.l.b16 %v438
    %v471 = vunpack.c.l.b16 %v439
    %v472 = vunpack.c.l.b16 %v440
    %v473 = vpack.c.b16 %v458, %v457
    %v474 = vpack.c.b16 %v460, %v459
    %v475 = vpack.c.b16 %v462, %v461
    %v476 = vpack.c.b16 %v464, %v463
    %v477 = vpack.c.b16 %v466, %v465
    %v478 = vpack.c.b16 %v468, %v467
    %v479 = vpack.c.b16 %v470, %v469
    %v480 = vpack.c.b16 %v472, %v471
    %489 = vmatprep.subr.bf16.mxu0 0
    %490 = vmatpush1.bf16.msra.mxu0 %v480
    %491 = vmatprep.subr.bf16.mxu0 0
    %492 = vmatpush1.bf16.msra.mxu0 %v479
    %493 = vmatprep.subr.bf16.mxu0 0
    %494 = vmatpush1.bf16.msra.mxu0 %v478
    %495 = vmatprep.subr.bf16.mxu0 0
    %496 = vmatpush1.bf16.msra.mxu0 %v477
    %497 = vmatprep.subr.bf16.mxu0 0
    %498 = vmatpush1.bf16.msra.mxu0 %v476
    %499 = vmatprep.subr.bf16.mxu0 0
    %500 = vmatpush1.bf16.msra.mxu0 %v475
    %501 = vmatprep.subr.bf16.mxu0 0
    %502 = vmatpush1.bf16.msra.mxu0 %v474
    %503 = vmatprep.subr.bf16.mxu0 0
    %504 = vmatpush1.bf16.msra.mxu0 %v473
    %505 = vmatprep.subr.bf16.mxu0 0
    %506 = vmatpush2.bf16.msra.mxu0 0
    %507 = vmatprep.subr.bf16.mxu0 0
    %508 = vmatpush2.bf16.msra.mxu0 0
    %509 = vmatprep.subr.bf16.mxu0 0
    %510 = vmatpush2.bf16.msra.mxu0 0
    %511 = vmatprep.subr.bf16.mxu0 0
    %512 = vmatpush2.bf16.msra.mxu0 0
    %513 = vmatprep.subr.bf16.mxu0 0
    %514 = vmatpush2.bf16.msra.mxu0 0
    %515 = vmatprep.subr.bf16.mxu0 0
    %516 = vmatpush2.bf16.msra.mxu0 0
    %517 = vmatprep.subr.bf16.mxu0 0
    %518 = vmatpush2.bf16.msra.mxu0 0
    %519 = vmatprep.subr.bf16.mxu0 0
    %520 = vmatpush2.bf16.msra.mxu0 0
    %521 = vmatprep.mubr.bf16.mxu0 0
    %522 = vmatmul.mubr.bf16.gmra.mxu0 %v153
    %v523 = vpop.f32.mrf.mxu0
    %v524 = vadd.f32 0.0, %v523
    %v525 = vpop.f32.mrf.mxu0
    %v526 = vpop.f32.mrf.mxu0
    %v527 = vadd.f32 0.0, %v526
    %v528 = vpop.f32.mrf.mxu0
    %529 = vmatprep.mubr.bf16.mxu0 0
    %530 = vmatmul.mubr.bf16.gmra.mxu0 %v154
    %v531 = vpop.f32.mrf.mxu0
    %v532 = vadd.f32 0.0, %v531
    %v533 = vpop.f32.mrf.mxu0
    %v534 = vpop.f32.mrf.mxu0
    %v535 = vadd.f32 0.0, %v534
    %v536 = vpop.f32.mrf.mxu0
    %537 = vdwg.mxu0
    %539 = vset.pattern.permute.xlu0 0
    %540 = vperm.xlu0 %539, %v420
    %v541 = vpop.permute.xlu0 %540
    %544 = vset.pattern.permute.xlu0 0
    %545 = vperm.xlu0 %544, %v421
    %v546 = vpop.permute.xlu0 %545
    %549 = vset.pattern.permute.xlu0 0
    %550 = vperm.xlu0 %549, %v422
    %v551 = vpop.permute.xlu0 %550
    %554 = vset.pattern.permute.xlu0 0
    %555 = vperm.xlu0 %554, %v423
    %v556 = vpop.permute.xlu0 %555
    %v558 = vmul.f32 %v541, %v524
    %v559 = vmul.f32 %v546, %v527
    %v560 = vmul.f32 %v551, %v532
    %v561 = vmul.f32 %v556, %v535
    %v562 = vadd.f32 %v415, %v558
    %v563 = vadd.f32 %v416, %v559
    %v564 = vadd.f32 %v417, %v560
    %v565 = vadd.f32 %v418, %v561
    %566 = vst [vmem:[#allocation2] sm:$0xff] %v562
    %567 = vst [vmem:[#allocation2 + $0x8] sm:$0xff] %v563
    %568 = vst [vmem:[#allocation2 + $0x10] sm:$0xff] %v564
    %569 = vst [vmem:[#allocation2 + $0x18] sm:$0xff] %v565
    %v570 = vld [vmem:[#allocation2 + $0x1] sm:$0xff]
    %v571 = vld [vmem:[#allocation2 + $0x9] sm:$0xff]
    %v572 = vld [vmem:[#allocation2 + $0x11] sm:$0xff]
    %v573 = vld [vmem:[#allocation2 + $0x19] sm:$0xff]
    %v574 = vadd.f32 %v570, %v571
    %v575 = vadd.f32 %v574, %v572
    %v576 = vadd.f32 %v575, %v573
    %v577 = vrot.slane %v576, 4
    %v578 = vadd.f32 %v576, %v577
    %v579 = vrot.slane %v578, 2
    %v580 = vadd.f32 %v578, %v579
    %v581 = vrot.slane %v580, 1
    %v582 = vadd.f32 %v580, %v581
    %v583 = vmul.f32 %v570, %v570
    %v584 = vmul.f32 %v571, %v571
    %v585 = vmul.f32 %v572, %v572
    %v586 = vmul.f32 %v573, %v573
    %v587 = vadd.f32 %v583, %v584
    %v588 = vadd.f32 %v587, %v585
    %v589 = vadd.f32 %v588, %v586
    %v590 = vrot.slane %v589, 4
    %v591 = vadd.f32 %v589, %v590
    %v592 = vrot.slane %v591, 2
    %v593 = vadd.f32 %v591, %v592
    %v594 = vrot.slane %v593, 1
    %v595 = vadd.f32 %v593, %v594
    %vm596 = vcmp.eq.s32.totalorder %v114, 0
    %v597 = vsel %vm596, 1, 0
    %vm598 = vcmp.eq.s32.totalorder %v597, 1
    %v599 = vsel %vm598, %v582, %v595
    %600 = vmatprep.subr.mxu0 0.0
    %601 = vmatpush1.msra.mxu0 %v111
    %602 = vmatprep.subr.mxu0 0.0
    %603 = vmatpush1.msra.mxu0 %v110
    %604 = vmatprep.subr.mxu0 0.0
    %605 = vmatpush1.msra.mxu0 %v109
    %606 = vmatprep.subr.mxu0 0.0
    %607 = vmatpush1.msra.mxu0 %v108
    %608 = vmatprep.subr.mxu0 0.0
    %609 = vmatpush1.msra.mxu0 %v107
    %610 = vmatprep.subr.mxu0 0.0
    %611 = vmatpush1.msra.mxu0 %v106
    %612 = vmatprep.subr.mxu0 0.0
    %613 = vmatpush1.msra.mxu0 %v105
    %614 = vmatprep.subr.mxu0 0.0
    %615 = vmatpush1.msra.mxu0 %v104
    %616 = vmatprep.subr.mxu0 0.0
    %617 = vmatpush1.msra.mxu0 %v103
    %618 = vmatprep.subr.mxu0 0.0
    %619 = vmatpush1.msra.mxu0 %v102
    %620 = vmatprep.subr.mxu0 0.0
    %621 = vmatpush1.msra.mxu0 %v101
    %622 = vmatprep.subr.mxu0 0.0
    %623 = vmatpush1.msra.mxu0 %v100
    %624 = vmatprep.subr.mxu0 0.0
    %625 = vmatpush1.msra.mxu0 %v99
    %626 = vmatprep.subr.mxu0 0.0
    %627 = vmatpush1.msra.mxu0 %v98
    %628 = vmatprep.subr.mxu0 0.0
    %629 = vmatpush1.msra.mxu0 %v97
    %630 = vmatprep.subr.mxu0 0.0
    %631 = vmatpush1.msra.mxu0 %v96
    %632 = vmatprep.subr.mxu0 0.0
    %633 = vmatpush2.msra.mxu0 0.0
    %634 = vmatprep.subr.mxu0 0.0
    %635 = vmatpush2.msra.mxu0 0.0
    %636 = vmatprep.subr.mxu0 0.0
    %637 = vmatpush2.msra.mxu0 0.0
    %638 = vmatprep.subr.mxu0 0.0
    %639 = vmatpush2.msra.mxu0 0.0
    %640 = vmatprep.subr.mxu0 0.0
    %641 = vmatpush2.msra.mxu0 0.0
    %642 = vmatprep.subr.mxu0 0.0
    %643 = vmatpush2.msra.mxu0 0.0
    %644 = vmatprep.subr.mxu0 0.0
    %645 = vmatpush2.msra.mxu0 0.0
    %646 = vmatprep.subr.mxu0 0.0
    %647 = vmatpush2.msra.mxu0 0.0
    %648 = vmatprep.subr.mxu0 0.0
    %649 = vmatpush2.msra.mxu0 0.0
    %650 = vmatprep.subr.mxu0 0.0
    %651 = vmatpush2.msra.mxu0 0.0
    %652 = vmatprep.subr.mxu0 0.0
    %653 = vmatpush2.msra.mxu0 0.0
    %654 = vmatprep.subr.mxu0 0.0
    %655 = vmatpush2.msra.mxu0 0.0
    %656 = vmatprep.subr.mxu0 0.0
    %657 = vmatpush2.msra.mxu0 0.0
    %658 = vmatprep.subr.mxu0 0.0
    %659 = vmatpush2.msra.mxu0 0.0
    %660 = vmatprep.subr.mxu0 0.0
    %661 = vmatpush2.msra.mxu0 0.0
    %662 = vmatprep.subr.mxu0 0.0
    %663 = vmatpush2.msra.mxu0 0.0
    %664 = vmatprep.mubr.f32.mxu0 0.0
    %665 = vmatmul.mubr.f32.gmra.mxu0 %v599
    %v666 = vpop.f32.mrf.mxu0
    %v667 = vadd.f32 0.0, %v666
    %v668 = vpop.f32.mrf.mxu0
    %669 = vdwg.mxu0
    %v670 = vmul.f32 %v667, 0.001953125
    %v671 = vmul.f32 %v670, %v670
    %v673 = vrot.slane %v671, 7
    %v675 = vsub.f32 %v670, %v673
    %v676 = vmax.f32 %v675, 0.0
    %v677 = vld [vmem:[#allocation5] sm:$0x1]
    %v678 = vadd.f32 %v676, 1e-05
    %v679 = vrsqrt.pop %v678
    %v682 = vunpack.c.l.s4 1966171168
    %v683 = vunpack.c.0.s8 %v682
    %v684 = vlaneseq
    %v685 = vshrl.u32 %v684, 7
    %v686 = vsub.s32 %v683, %v685
    %v687 = vrot.slane %v679, %v686
    %v688 = vcombine.high %v687, %v687
    %v690 = vunpack.c.l.s4 1966171168
    %v691 = vunpack.c.0.s8 %v690
    %v692 = vlaneseq
    %v693 = vshrl.u32 %v692, 7
    %v694 = vsub.s32 %v691, %v693
    %v695 = vrot.slane %v688, %v694
    %v697 = vmul.f32 %v677, %v695
    %v698 = vld [vmem:[%s5] sm:$0x1]
    %v699 = vmul.f32 %v670, %v697
    %v700 = vsub.f32 %v698, %v699
    %v702 = vlaneseq
    %v703 = vshrl.u32 %v702, 7
    %v704 = vsub.s32 0, %v703
    %v705 = vrot.slane %v697, %v704
    %v708 = vlaneseq
    %v709 = vshrl.u32 %v708, 7
    %v710 = vsub.s32 0, %v709
    %v711 = vrot.slane %v700, %v710
    %v713 = vsel %vm598, %v705, %v711
    %vm714 = vcmask 64512
    %v716 = vsel %vm714, %v713, 0
    %718 = vmatprep.subr.mxu0 0.0
    %719 = vmatpush1.msra.mxu0 0.0
    %720 = vmatprep.subr.mxu0 0.0
    %721 = vmatpush1.msra.mxu0 0.0
    %722 = vmatprep.subr.mxu0 0.0
    %723 = vmatpush1.msra.mxu0 0.0
    %724 = vmatprep.subr.mxu0 0.0
    %725 = vmatpush1.msra.mxu0 0.0
    %726 = vmatprep.subr.mxu0 0.0
    %727 = vmatpush1.msra.mxu0 0.0
    %728 = vmatprep.subr.mxu0 0.0
    %729 = vmatpush1.msra.mxu0 0.0
    %730 = vmatprep.subr.mxu0 0.0
    %731 = vmatpush1.msra.mxu0 0.0
    %732 = vmatprep.subr.mxu0 0.0
    %733 = vmatpush1.msra.mxu0 0.0
    %734 = vmatprep.subr.mxu0 0.0
    %735 = vmatpush1.msra.mxu0 0.0
    %736 = vmatprep.subr.mxu0 0.0
    %737 = vmatpush1.msra.mxu0 0.0
    %738 = vmatprep.subr.mxu0 0.0
    %739 = vmatpush1.msra.mxu0 0.0
    %740 = vmatprep.subr.mxu0 0.0
    %741 = vmatpush1.msra.mxu0 0.0
    %742 = vmatprep.subr.mxu0 0.0
    %743 = vmatpush1.msra.mxu0 0.0
    %744 = vmatprep.subr.mxu0 0.0
    %745 = vmatpush1.msra.mxu0 0.0
    %746 = vmatprep.subr.mxu0 0.0
    %747 = vmatpush1.msra.mxu0 0.0
    %748 = vmatprep.subr.mxu0 0.0
    %749 = vmatpush1.msra.mxu0 %v112
    %750 = vmatprep.subr.mxu0 0.0
    %751 = vmatpush2.msra.mxu0 0.0
    %752 = vmatprep.subr.mxu0 0.0
    %753 = vmatpush2.msra.mxu0 0.0
    %754 = vmatprep.subr.mxu0 0.0
    %755 = vmatpush2.msra.mxu0 0.0
    %756 = vmatprep.subr.mxu0 0.0
    %757 = vmatpush2.msra.mxu0 0.0
    %758 = vmatprep.subr.mxu0 0.0
    %759 = vmatpush2.msra.mxu0 0.0
    %760 = vmatprep.subr.mxu0 0.0
    %761 = vmatpush2.msra.mxu0 0.0
    %762 = vmatprep.subr.mxu0 0.0
    %763 = vmatpush2.msra.mxu0 0.0
    %764 = vmatprep.subr.mxu0 0.0
    %765 = vmatpush2.msra.mxu0 0.0
    %766 = vmatprep.subr.mxu0 0.0
    %767 = vmatpush2.msra.mxu0 0.0
    %768 = vmatprep.subr.mxu0 0.0
    %769 = vmatpush2.msra.mxu0 0.0
    %770 = vmatprep.subr.mxu0 0.0
    %771 = vmatpush2.msra.mxu0 0.0
    %772 = vmatprep.subr.mxu0 0.0
    %773 = vmatpush2.msra.mxu0 0.0
    %774 = vmatprep.subr.mxu0 0.0
    %775 = vmatpush2.msra.mxu0 0.0
    %776 = vmatprep.subr.mxu0 0.0
    %777 = vmatpush2.msra.mxu0 0.0
    %778 = vmatprep.subr.mxu0 0.0
    %779 = vmatpush2.msra.mxu0 0.0
    %780 = vmatprep.subr.mxu0 0.0
    %781 = vmatpush2.msra.mxu0 0.0
    %782 = vmatprep.mubr.f32.mxu0 0.0
    %783 = vmatmul.mubr.f32.gmra.mxu0 %v716
    %v784 = vpop.f32.mrf.mxu0
    %v785 = vadd.f32 0.0, %v784
    %v786 = vpop.f32.mrf.mxu0
    %787 = vdwg.mxu0
    %v788 = vlaneseq
    %v789 = vshrl.u32 %v788, 7
    %v790 = vsub.s32 0, %v789
    %v791 = vrot.slane %v785, %v790
    %v792 = vmul.f32 %v570, %v791
    %v793 = vmul.f32 %v571, %v791
    %v794 = vmul.f32 %v572, %v791
    %v795 = vmul.f32 %v573, %v791
    %v796 = vlaneseq
    %v797 = vshrl.u32 %v796, 7
    %v798 = vsub.s32 1, %v797
    %v799 = vrot.slane %v785, %v798
    %v800 = vadd.f32 %v792, %v799
    %v801 = vadd.f32 %v793, %v799
    %v802 = vadd.f32 %v794, %v799
    %v803 = vadd.f32 %v795, %v799
    %v804 = vmax.f32 %v800, 0.0
    %v805 = vmax.f32 %v801, 0.0
    %v806 = vmax.f32 %v802, 0.0
    %v807 = vmax.f32 %v803, 0.0
    %v808 = vpack.c.bf16 %v805, %v804
    %v809 = vpack.c.bf16 %v807, %v806
    %810 = vst [vmem:[#allocation2] sm:$0xff] 0.0
    %811 = vst [vmem:[#allocation2 + $0x8] sm:$0xff] 0.0
    %812 = vst [vmem:[#allocation2 + $0x10] sm:$0xff] 0.0
    %813 = vst [vmem:[#allocation2 + $0x18] sm:$0xff] 0.0
    %814 = vst [vmem:[#allocation2 + $0x20] sm:$0x3] 0.0
    %v815 = vld [vmem:[#allocation2 + $0x1] sm:$0xff]
    %v816 = vld [vmem:[#allocation2 + $0x9] sm:$0xff]
    %v817 = vld [vmem:[#allocation2 + $0x11] sm:$0xff]
    %v818 = vld [vmem:[#allocation2 + $0x19] sm:$0xff]
    %s819 = scalar_lea.vmem %s2, 64
    %v820 = vld [vmem:[%s819] sm:$0xf]
    %v821 = vld [vmem:[%s819 + $0x4] sm:$0xf]
    %v822 = vld [vmem:[%s819 + $0x8] sm:$0xf]
    %v823 = vld [vmem:[%s819 + $0xc] sm:$0xf]
    %v824 = vld [vmem:[%s819 + $0x10] sm:$0xf]
    %v825 = vld [vmem:[%s819 + $0x14] sm:$0xf]
    %v826 = vld [vmem:[%s819 + $0x18] sm:$0xf]
    %v827 = vld [vmem:[%s819 + $0x1c] sm:$0xf]
    %v828 = vld [vmem:[%s819 + $0x20] sm:$0xf]
    %v829 = vld [vmem:[%s819 + $0x24] sm:$0xf]
    %v830 = vld [vmem:[%s819 + $0x28] sm:$0xf]
    %v831 = vld [vmem:[%s819 + $0x2c] sm:$0xf]
    %v832 = vld [vmem:[%s819 + $0x30] sm:$0xf]
    %v833 = vld [vmem:[%s819 + $0x34] sm:$0xf]
    %v834 = vld [vmem:[%s819 + $0x38] sm:$0xf]
    %v835 = vld [vmem:[%s819 + $0x3c] sm:$0xf]
    %v852 = vunpack.c.l.b16 %v820
    %v853 = vunpack.c.l.b16 %v821
    %v854 = vunpack.c.l.b16 %v822
    %v855 = vunpack.c.l.b16 %v823
    %v856 = vunpack.c.l.b16 %v824
    %v857 = vunpack.c.l.b16 %v825
    %v858 = vunpack.c.l.b16 %v826
    %v859 = vunpack.c.l.b16 %v827
    %v860 = vunpack.c.l.b16 %v828
    %v861 = vunpack.c.l.b16 %v829
    %v862 = vunpack.c.l.b16 %v830
    %v863 = vunpack.c.l.b16 %v831
    %v864 = vunpack.c.l.b16 %v832
    %v865 = vunpack.c.l.b16 %v833
    %v866 = vunpack.c.l.b16 %v834
    %v867 = vunpack.c.l.b16 %v835
    %v868 = vpack.c.b16 %v853, %v852
    %v869 = vpack.c.b16 %v855, %v854
    %v870 = vpack.c.b16 %v857, %v856
    %v871 = vpack.c.b16 %v859, %v858
    %v872 = vpack.c.b16 %v861, %v860
    %v873 = vpack.c.b16 %v863, %v862
    %v874 = vpack.c.b16 %v865, %v864
    %v875 = vpack.c.b16 %v867, %v866
    %884 = vmatprep.subr.bf16.mxu0 0
    %885 = vmatpush1.bf16.msra.mxu0 %v875
    %886 = vmatprep.subr.bf16.mxu0 0
    %887 = vmatpush1.bf16.msra.mxu0 %v874
    %888 = vmatprep.subr.bf16.mxu0 0
    %889 = vmatpush1.bf16.msra.mxu0 %v873
    %890 = vmatprep.subr.bf16.mxu0 0
    %891 = vmatpush1.bf16.msra.mxu0 %v872
    %892 = vmatprep.subr.bf16.mxu0 0
    %893 = vmatpush1.bf16.msra.mxu0 %v871
    %894 = vmatprep.subr.bf16.mxu0 0
    %895 = vmatpush1.bf16.msra.mxu0 %v870
    %896 = vmatprep.subr.bf16.mxu0 0
    %897 = vmatpush1.bf16.msra.mxu0 %v869
    %898 = vmatprep.subr.bf16.mxu0 0
    %899 = vmatpush1.bf16.msra.mxu0 %v868
    %900 = vmatprep.subr.bf16.mxu0 0
    %901 = vmatpush2.bf16.msra.mxu0 0
    %902 = vmatprep.subr.bf16.mxu0 0
    %903 = vmatpush2.bf16.msra.mxu0 0
    %904 = vmatprep.subr.bf16.mxu0 0
    %905 = vmatpush2.bf16.msra.mxu0 0
    %906 = vmatprep.subr.bf16.mxu0 0
    %907 = vmatpush2.bf16.msra.mxu0 0
    %908 = vmatprep.subr.bf16.mxu0 0
    %909 = vmatpush2.bf16.msra.mxu0 0
    %910 = vmatprep.subr.bf16.mxu0 0
    %911 = vmatpush2.bf16.msra.mxu0 0
    %912 = vmatprep.subr.bf16.mxu0 0
    %913 = vmatpush2.bf16.msra.mxu0 0
    %914 = vmatprep.subr.bf16.mxu0 0
    %915 = vmatpush2.bf16.msra.mxu0 0
    %916 = vmatprep.mubr.bf16.mxu0 0
    %917 = vmatmul.mubr.bf16.gmra.mxu0 %v808
    %v918 = vpop.f32.mrf.mxu0
    %v919 = vadd.f32 0.0, %v918
    %v920 = vpop.f32.mrf.mxu0
    %v921 = vpop.f32.mrf.mxu0
    %v922 = vadd.f32 0.0, %v921
    %v923 = vpop.f32.mrf.mxu0
    %924 = vmatprep.mubr.bf16.mxu0 0
    %925 = vmatmul.mubr.bf16.gmra.mxu0 %v809
    %v926 = vpop.f32.mrf.mxu0
    %v927 = vadd.f32 0.0, %v926
    %v928 = vpop.f32.mrf.mxu0
    %v929 = vpop.f32.mrf.mxu0
    %v930 = vadd.f32 0.0, %v929
    %v931 = vpop.f32.mrf.mxu0
    %932 = vdwg.mxu0
    %v933 = vadd.f32 %v815, %v919
    %v934 = vadd.f32 %v816, %v922
    %v935 = vadd.f32 %v817, %v927
    %v936 = vadd.f32 %v818, %v930
    %937 = vst [vmem:[#allocation2 + $0x1] sm:$0xff] %v933
    %938 = vst [vmem:[#allocation2 + $0x9] sm:$0xff] %v934
    %939 = vst [vmem:[#allocation2 + $0x11] sm:$0xff] %v935
    %940 = vst [vmem:[#allocation2 + $0x19] sm:$0xff] %v936
    %v941 = vld [vmem:[#allocation2 + $0x2] sm:$0xff]
    %v942 = vld [vmem:[#allocation2 + $0xa] sm:$0xff]
    %v943 = vld [vmem:[#allocation2 + $0x12] sm:$0xff]
    %v944 = vld [vmem:[#allocation2 + $0x1a] sm:$0xff]
    %v945 = vld [vmem:[#allocation3] sm:$0xff]
    %v946 = vld [vmem:[#allocation3 + $0x8] sm:$0xff]
    %v947 = vld [vmem:[#allocation3 + $0x10] sm:$0xff]
    %v948 = vld [vmem:[#allocation3 + $0x18] sm:$0xff]
    %v949 = vld [vmem:[%s2] sm:$0xf]
    %v950 = vld [vmem:[%s2 + $0x4] sm:$0xf]
    %v951 = vld [vmem:[%s2 + $0x8] sm:$0xf]
    %v952 = vld [vmem:[%s2 + $0xc] sm:$0xf]
    %v953 = vld [vmem:[%s2 + $0x10] sm:$0xf]
    %v954 = vld [vmem:[%s2 + $0x14] sm:$0xf]
    %v955 = vld [vmem:[%s2 + $0x18] sm:$0xf]
    %v956 = vld [vmem:[%s2 + $0x1c] sm:$0xf]
    %v957 = vld [vmem:[%s2 + $0x20] sm:$0xf]
    %v958 = vld [vmem:[%s2 + $0x24] sm:$0xf]
    %v959 = vld [vmem:[%s2 + $0x28] sm:$0xf]
    %v960 = vld [vmem:[%s2 + $0x2c] sm:$0xf]
    %v961 = vld [vmem:[%s2 + $0x30] sm:$0xf]
    %v962 = vld [vmem:[%s2 + $0x34] sm:$0xf]
    %v963 = vld [vmem:[%s2 + $0x38] sm:$0xf]
    %v964 = vld [vmem:[%s2 + $0x3c] sm:$0xf]
    %v981 = vunpack.c.l.b16 %v949
    %v982 = vunpack.c.l.b16 %v950
    %v983 = vunpack.c.l.b16 %v951
    %v984 = vunpack.c.l.b16 %v952
    %v985 = vunpack.c.l.b16 %v953
    %v986 = vunpack.c.l.b16 %v954
    %v987 = vunpack.c.l.b16 %v955
    %v988 = vunpack.c.l.b16 %v956
    %v989 = vunpack.c.l.b16 %v957
    %v990 = vunpack.c.l.b16 %v958
    %v991 = vunpack.c.l.b16 %v959
    %v992 = vunpack.c.l.b16 %v960
    %v993 = vunpack.c.l.b16 %v961
    %v994 = vunpack.c.l.b16 %v962
    %v995 = vunpack.c.l.b16 %v963
    %v996 = vunpack.c.l.b16 %v964
    %v997 = vpack.c.b16 %v982, %v981
    %v998 = vpack.c.b16 %v984, %v983
    %v999 = vpack.c.b16 %v986, %v985
    %v1000 = vpack.c.b16 %v988, %v987
    %v1001 = vpack.c.b16 %v990, %v989
    %v1002 = vpack.c.b16 %v992, %v991
    %v1003 = vpack.c.b16 %v994, %v993
    %v1004 = vpack.c.b16 %v996, %v995
    %1013 = vmatprep.subr.bf16.mxu0 0
    %1014 = vmatpush1.bf16.msra.mxu0 %v1004
    %1015 = vmatprep.subr.bf16.mxu0 0
    %1016 = vmatpush1.bf16.msra.mxu0 %v1003
    %1017 = vmatprep.subr.bf16.mxu0 0
    %1018 = vmatpush1.bf16.msra.mxu0 %v1002
    %1019 = vmatprep.subr.bf16.mxu0 0
    %1020 = vmatpush1.bf16.msra.mxu0 %v1001
    %1021 = vmatprep.subr.bf16.mxu0 0
    %1022 = vmatpush1.bf16.msra.mxu0 %v1000
    %1023 = vmatprep.subr.bf16.mxu0 0
    %1024 = vmatpush1.bf16.msra.mxu0 %v999
    %1025 = vmatprep.subr.bf16.mxu0 0
    %1026 = vmatpush1.bf16.msra.mxu0 %v998
    %1027 = vmatprep.subr.bf16.mxu0 0
    %1028 = vmatpush1.bf16.msra.mxu0 %v997
    %1029 = vmatprep.subr.bf16.mxu0 0
    %1030 = vmatpush2.bf16.msra.mxu0 0
    %1031 = vmatprep.subr.bf16.mxu0 0
    %1032 = vmatpush2.bf16.msra.mxu0 0
    %1033 = vmatprep.subr.bf16.mxu0 0
    %1034 = vmatpush2.bf16.msra.mxu0 0
    %1035 = vmatprep.subr.bf16.mxu0 0
    %1036 = vmatpush2.bf16.msra.mxu0 0
    %1037 = vmatprep.subr.bf16.mxu0 0
    %1038 = vmatpush2.bf16.msra.mxu0 0
    %1039 = vmatprep.subr.bf16.mxu0 0
    %1040 = vmatpush2.bf16.msra.mxu0 0
    %1041 = vmatprep.subr.bf16.mxu0 0
    %1042 = vmatpush2.bf16.msra.mxu0 0
    %1043 = vmatprep.subr.bf16.mxu0 0
    %1044 = vmatpush2.bf16.msra.mxu0 0
    %1045 = vmatprep.mubr.bf16.mxu0 0
    %1046 = vmatmul.mubr.bf16.gmra.mxu0 %v808
    %v1047 = vpop.f32.mrf.mxu0
    %v1048 = vadd.f32 0.0, %v1047
    %v1049 = vpop.f32.mrf.mxu0
    %v1050 = vpop.f32.mrf.mxu0
    %v1051 = vadd.f32 0.0, %v1050
    %v1052 = vpop.f32.mrf.mxu0
    %1053 = vmatprep.mubr.bf16.mxu0 0
    %1054 = vmatmul.mubr.bf16.gmra.mxu0 %v809
    %v1055 = vpop.f32.mrf.mxu0
    %v1056 = vadd.f32 0.0, %v1055
    %v1057 = vpop.f32.mrf.mxu0
    %v1058 = vpop.f32.mrf.mxu0
    %v1059 = vadd.f32 0.0, %v1058
    %v1060 = vpop.f32.mrf.mxu0
    %1061 = vdwg.mxu0
    %1063 = vset.pattern.permute.xlu0 0
    %1064 = vperm.xlu0 %1063, %v945
    %v1065 = vpop.permute.xlu0 %1064
    %1068 = vset.pattern.permute.xlu0 0
    %1069 = vperm.xlu0 %1068, %v946
    %v1070 = vpop.permute.xlu0 %1069
    %1073 = vset.pattern.permute.xlu0 0
    %1074 = vperm.xlu0 %1073, %v947
    %v1075 = vpop.permute.xlu0 %1074
    %1078 = vset.pattern.permute.xlu0 0
    %1079 = vperm.xlu0 %1078, %v948
    %v1080 = vpop.permute.xlu0 %1079
    %v1082 = vmul.f32 %v1065, %v1048
    %v1083 = vmul.f32 %v1070, %v1051
    %v1084 = vmul.f32 %v1075, %v1056
    %v1085 = vmul.f32 %v1080, %v1059
    %v1086 = vadd.f32 %v941, %v1082
    %v1087 = vadd.f32 %v942, %v1083
    %v1088 = vadd.f32 %v943, %v1084
    %v1089 = vadd.f32 %v944, %v1085
    %1090 = vst [vmem:[#allocation2 + $0x2] sm:$0xff] %v1086
    %1091 = vst [vmem:[#allocation2 + $0xa] sm:$0xff] %v1087
    %1092 = vst [vmem:[#allocation2 + $0x12] sm:$0xff] %v1088
    %1093 = vst [vmem:[#allocation2 + $0x1a] sm:$0xff] %v1089
    %v1094 = vld [vmem:[#allocation2] sm:$0xff]
    %v1095 = vld [vmem:[#allocation2 + $0x8] sm:$0xff]
    %v1096 = vld [vmem:[#allocation2 + $0x10] sm:$0xff]
    %v1097 = vld [vmem:[#allocation2 + $0x18] sm:$0xff]
    %v1098 = vld [vmem:[%s419] sm:$0xff]
    %v1099 = vld [vmem:[%s419 + $0x8] sm:$0xff]
    %v1100 = vld [vmem:[%s419 + $0x10] sm:$0xff]
    %v1101 = vld [vmem:[%s419 + $0x18] sm:$0xff]
    %s1102 = scalar_lea.vmem %s2, 128
    %v1103 = vld [vmem:[%s1102] sm:$0xf]
    %v1104 = vld [vmem:[%s1102 + $0x4] sm:$0xf]
    %v1105 = vld [vmem:[%s1102 + $0x8] sm:$0xf]
    %v1106 = vld [vmem:[%s1102 + $0xc] sm:$0xf]
    %v1107 = vld [vmem:[%s1102 + $0x10] sm:$0xf]
    %v1108 = vld [vmem:[%s1102 + $0x14] sm:$0xf]
    %v1109 = vld [vmem:[%s1102 + $0x18] sm:$0xf]
    %v1110 = vld [vmem:[%s1102 + $0x1c] sm:$0xf]
    %v1111 = vld [vmem:[%s1102 + $0x20] sm:$0xf]
    %v1112 = vld [vmem:[%s1102 + $0x24] sm:$0xf]
    %v1113 = vld [vmem:[%s1102 + $0x28] sm:$0xf]
    %v1114 = vld [vmem:[%s1102 + $0x2c] sm:$0xf]
    %v1115 = vld [vmem:[%s1102 + $0x30] sm:$0xf]
    %v1116 = vld [vmem:[%s1102 + $0x34] sm:$0xf]
    %v1117 = vld [vmem:[%s1102 + $0x38] sm:$0xf]
    %v1118 = vld [vmem:[%s1102 + $0x3c] sm:$0xf]
    %v1135 = vunpack.c.l.b16 %v1103
    %v1136 = vunpack.c.l.b16 %v1104
    %v1137 = vunpack.c.l.b16 %v1105
    %v1138 = vunpack.c.l.b16 %v1106
    %v1139 = vunpack.c.l.b16 %v1107
    %v1140 = vunpack.c.l.b16 %v1108
    %v1141 = vunpack.c.l.b16 %v1109
    %v1142 = vunpack.c.l.b16 %v1110
    %v1143 = vunpack.c.l.b16 %v1111
    %v1144 = vunpack.c.l.b16 %v1112
    %v1145 = vunpack.c.l.b16 %v1113
    %v1146 = vunpack.c.l.b16 %v1114
    %v1147 = vunpack.c.l.b16 %v1115
    %v1148 = vunpack.c.l.b16 %v1116
    %v1149 = vunpack.c.l.b16 %v1117
    %v1150 = vunpack.c.l.b16 %v1118
    %v1151 = vpack.c.b16 %v1136, %v1135
    %v1152 = vpack.c.b16 %v1138, %v1137
    %v1153 = vpack.c.b16 %v1140, %v1139
    %v1154 = vpack.c.b16 %v1142, %v1141
    %v1155 = vpack.c.b16 %v1144, %v1143
    %v1156 = vpack.c.b16 %v1146, %v1145
    %v1157 = vpack.c.b16 %v1148, %v1147
    %v1158 = vpack.c.b16 %v1150, %v1149
    %1167 = vmatprep.subr.bf16.mxu0 0
    %1168 = vmatpush1.bf16.msra.mxu0 %v1158
    %1169 = vmatprep.subr.bf16.mxu0 0
    %1170 = vmatpush1.bf16.msra.mxu0 %v1157
    %1171 = vmatprep.subr.bf16.mxu0 0
    %1172 = vmatpush1.bf16.msra.mxu0 %v1156
    %1173 = vmatprep.subr.bf16.mxu0 0
    %1174 = vmatpush1.bf16.msra.mxu0 %v1155
    %1175 = vmatprep.subr.bf16.mxu0 0
    %1176 = vmatpush1.bf16.msra.mxu0 %v1154
    %1177 = vmatprep.subr.bf16.mxu0 0
    %1178 = vmatpush1.bf16.msra.mxu0 %v1153
    %1179 = vmatprep.subr.bf16.mxu0 0
    %1180 = vmatpush1.bf16.msra.mxu0 %v1152
    %1181 = vmatprep.subr.bf16.mxu0 0
    %1182 = vmatpush1.bf16.msra.mxu0 %v1151
    %1183 = vmatprep.subr.bf16.mxu0 0
    %1184 = vmatpush2.bf16.msra.mxu0 0
    %1185 = vmatprep.subr.bf16.mxu0 0
    %1186 = vmatpush2.bf16.msra.mxu0 0
    %1187 = vmatprep.subr.bf16.mxu0 0
    %1188 = vmatpush2.bf16.msra.mxu0 0
    %1189 = vmatprep.subr.bf16.mxu0 0
    %1190 = vmatpush2.bf16.msra.mxu0 0
    %1191 = vmatprep.subr.bf16.mxu0 0
    %1192 = vmatpush2.bf16.msra.mxu0 0
    %1193 = vmatprep.subr.bf16.mxu0 0
    %1194 = vmatpush2.bf16.msra.mxu0 0
    %1195 = vmatprep.subr.bf16.mxu0 0
    %1196 = vmatpush2.bf16.msra.mxu0 0
    %1197 = vmatprep.subr.bf16.mxu0 0
    %1198 = vmatpush2.bf16.msra.mxu0 0
    %1199 = vmatprep.mubr.bf16.mxu0 0
    %1200 = vmatmul.mubr.bf16.gmra.mxu0 %v808
    %v1201 = vpop.f32.mrf.mxu0
    %v1202 = vadd.f32 0.0, %v1201
    %v1203 = vpop.f32.mrf.mxu0
    %v1204 = vpop.f32.mrf.mxu0
    %v1205 = vadd.f32 0.0, %v1204
    %v1206 = vpop.f32.mrf.mxu0
    %1207 = vmatprep.mubr.bf16.mxu0 0
    %1208 = vmatmul.mubr.bf16.gmra.mxu0 %v809
    %v1209 = vpop.f32.mrf.mxu0
    %v1210 = vadd.f32 0.0, %v1209
    %v1211 = vpop.f32.mrf.mxu0
    %v1212 = vpop.f32.mrf.mxu0
    %v1213 = vadd.f32 0.0, %v1212
    %v1214 = vpop.f32.mrf.mxu0
    %1215 = vdwg.mxu0
    %1217 = vset.pattern.permute.xlu0 0
    %1218 = vperm.xlu0 %1217, %v1098
    %v1219 = vpop.permute.xlu0 %1218
    %1222 = vset.pattern.permute.xlu0 0
    %1223 = vperm.xlu0 %1222, %v1099
    %v1224 = vpop.permute.xlu0 %1223
    %1227 = vset.pattern.permute.xlu0 0
    %1228 = vperm.xlu0 %1227, %v1100
    %v1229 = vpop.permute.xlu0 %1228
    %1232 = vset.pattern.permute.xlu0 0
    %1233 = vperm.xlu0 %1232, %v1101
    %v1234 = vpop.permute.xlu0 %1233
    %v1236 = vmul.f32 %v1219, %v1202
    %v1237 = vmul.f32 %v1224, %v1205
    %v1238 = vmul.f32 %v1229, %v1210
    %v1239 = vmul.f32 %v1234, %v1213
    %v1240 = vadd.f32 %v1094, %v1236
    %v1241 = vadd.f32 %v1095, %v1237
    %v1242 = vadd.f32 %v1096, %v1238
    %v1243 = vadd.f32 %v1097, %v1239
    %1244 = vst [vmem:[#allocation2] sm:$0xff] %v1240
    %1245 = vst [vmem:[#allocation2 + $0x8] sm:$0xff] %v1241
    %1246 = vst [vmem:[#allocation2 + $0x10] sm:$0xff] %v1242
    %1247 = vst [vmem:[#allocation2 + $0x18] sm:$0xff] %v1243
    %v1248 = vld [vmem:[#allocation2 + $0x1] sm:$0xff]
    %v1249 = vld [vmem:[#allocation2 + $0x9] sm:$0xff]
    %v1250 = vld [vmem:[#allocation2 + $0x11] sm:$0xff]
    %v1251 = vld [vmem:[#allocation2 + $0x19] sm:$0xff]
    %v1252 = vadd.f32 %v1248, %v1249
    %v1253 = vadd.f32 %v1252, %v1250
    %v1254 = vadd.f32 %v1253, %v1251
    %v1255 = vrot.slane %v1254, 4
    %v1256 = vadd.f32 %v1254, %v1255
    %v1257 = vrot.slane %v1256, 2
    %v1258 = vadd.f32 %v1256, %v1257
    %v1259 = vrot.slane %v1258, 1
    %v1260 = vadd.f32 %v1258, %v1259
    %v1261 = vmul.f32 %v1248, %v1248
    %v1262 = vmul.f32 %v1249, %v1249
    %v1263 = vmul.f32 %v1250, %v1250
    %v1264 = vmul.f32 %v1251, %v1251
    %v1265 = vadd.f32 %v1261, %v1262
    %v1266 = vadd.f32 %v1265, %v1263
    %v1267 = vadd.f32 %v1266, %v1264
    %v1268 = vrot.slane %v1267, 4
    %v1269 = vadd.f32 %v1267, %v1268
    %v1270 = vrot.slane %v1269, 2
    %v1271 = vadd.f32 %v1269, %v1270
    %v1272 = vrot.slane %v1271, 1
    %v1273 = vadd.f32 %v1271, %v1272
    %v1274 = vsel %vm598, %v1260, %v1273
    %1275 = vmatprep.subr.mxu0 0.0
    %1276 = vmatpush1.msra.mxu0 %v111
    %1277 = vmatprep.subr.mxu0 0.0
    %1278 = vmatpush1.msra.mxu0 %v110
    %1279 = vmatprep.subr.mxu0 0.0
    %1280 = vmatpush1.msra.mxu0 %v109
    %1281 = vmatprep.subr.mxu0 0.0
    %1282 = vmatpush1.msra.mxu0 %v108
    %1283 = vmatprep.subr.mxu0 0.0
    %1284 = vmatpush1.msra.mxu0 %v107
    %1285 = vmatprep.subr.mxu0 0.0
    %1286 = vmatpush1.msra.mxu0 %v106
    %1287 = vmatprep.subr.mxu0 0.0
    %1288 = vmatpush1.msra.mxu0 %v105
    %1289 = vmatprep.subr.mxu0 0.0
    %1290 = vmatpush1.msra.mxu0 %v104
    %1291 = vmatprep.subr.mxu0 0.0
    %1292 = vmatpush1.msra.mxu0 %v103
    %1293 = vmatprep.subr.mxu0 0.0
    %1294 = vmatpush1.msra.mxu0 %v102
    %1295 = vmatprep.subr.mxu0 0.0
    %1296 = vmatpush1.msra.mxu0 %v101
    %1297 = vmatprep.subr.mxu0 0.0
    %1298 = vmatpush1.msra.mxu0 %v100
    %1299 = vmatprep.subr.mxu0 0.0
    %1300 = vmatpush1.msra.mxu0 %v99
    %1301 = vmatprep.subr.mxu0 0.0
    %1302 = vmatpush1.msra.mxu0 %v98
    %1303 = vmatprep.subr.mxu0 0.0
    %1304 = vmatpush1.msra.mxu0 %v97
    %1305 = vmatprep.subr.mxu0 0.0
    %1306 = vmatpush1.msra.mxu0 %v96
    %1307 = vmatprep.subr.mxu0 0.0
    %1308 = vmatpush2.msra.mxu0 0.0
    %1309 = vmatprep.subr.mxu0 0.0
    %1310 = vmatpush2.msra.mxu0 0.0
    %1311 = vmatprep.subr.mxu0 0.0
    %1312 = vmatpush2.msra.mxu0 0.0
    %1313 = vmatprep.subr.mxu0 0.0
    %1314 = vmatpush2.msra.mxu0 0.0
    %1315 = vmatprep.subr.mxu0 0.0
    %1316 = vmatpush2.msra.mxu0 0.0
    %1317 = vmatprep.subr.mxu0 0.0
    %1318 = vmatpush2.msra.mxu0 0.0
    %1319 = vmatprep.subr.mxu0 0.0
    %1320 = vmatpush2.msra.mxu0 0.0
    %1321 = vmatprep.subr.mxu0 0.0
    %1322 = vmatpush2.msra.mxu0 0.0
    %1323 = vmatprep.subr.mxu0 0.0
    %1324 = vmatpush2.msra.mxu0 0.0
    %1325 = vmatprep.subr.mxu0 0.0
    %1326 = vmatpush2.msra.mxu0 0.0
    %1327 = vmatprep.subr.mxu0 0.0
    %1328 = vmatpush2.msra.mxu0 0.0
    %1329 = vmatprep.subr.mxu0 0.0
    %1330 = vmatpush2.msra.mxu0 0.0
    %1331 = vmatprep.subr.mxu0 0.0
    %1332 = vmatpush2.msra.mxu0 0.0
    %1333 = vmatprep.subr.mxu0 0.0
    %1334 = vmatpush2.msra.mxu0 0.0
    %1335 = vmatprep.subr.mxu0 0.0
    %1336 = vmatpush2.msra.mxu0 0.0
    %1337 = vmatprep.subr.mxu0 0.0
    %1338 = vmatpush2.msra.mxu0 0.0
    %1339 = vmatprep.mubr.f32.mxu0 0.0
    %1340 = vmatmul.mubr.f32.gmra.mxu0 %v1274
    %v1341 = vpop.f32.mrf.mxu0
    %v1342 = vadd.f32 0.0, %v1341
    %v1343 = vpop.f32.mrf.mxu0
    %1344 = vdwg.mxu0
    %v1345 = vmul.f32 %v1342, 0.001953125
    %v1346 = vmul.f32 %v1345, %v1345
    %v1348 = vrot.slane %v1346, 7
    %v1350 = vsub.f32 %v1345, %v1348
    %v1351 = vmax.f32 %v1350, 0.0
    %v1352 = vld [vmem:[%s6] sm:$0x1]
    %v1353 = vadd.f32 %v1351, 1e-05
    %v1354 = vrsqrt.pop %v1353
    %v1357 = vunpack.c.l.s4 1966171168
    %v1358 = vunpack.c.0.s8 %v1357
    %v1359 = vlaneseq
    %v1360 = vshrl.u32 %v1359, 7
    %v1361 = vsub.s32 %v1358, %v1360
    %v1362 = vrot.slane %v1354, %v1361
    %v1363 = vcombine.high %v1362, %v1362
    %v1365 = vunpack.c.l.s4 1966171168
    %v1366 = vunpack.c.0.s8 %v1365
    %v1367 = vlaneseq
    %v1368 = vshrl.u32 %v1367, 7
    %v1369 = vsub.s32 %v1366, %v1368
    %v1370 = vrot.slane %v1363, %v1369
    %v1372 = vmul.f32 %v1352, %v1370
    %v1373 = vld [vmem:[%s7] sm:$0x1]
    %v1374 = vmul.f32 %v1345, %v1372
    %v1375 = vsub.f32 %v1373, %v1374
    %v1377 = vlaneseq
    %v1378 = vshrl.u32 %v1377, 7
    %v1379 = vsub.s32 0, %v1378
    %v1380 = vrot.slane %v1372, %v1379
    %v1383 = vlaneseq
    %v1384 = vshrl.u32 %v1383, 7
    %v1385 = vsub.s32 0, %v1384
    %v1386 = vrot.slane %v1375, %v1385
    %v1388 = vsel %vm598, %v1380, %v1386
    %v1390 = vsel %vm714, %v1388, 0
    %1392 = vmatprep.subr.mxu0 0.0
    %1393 = vmatpush1.msra.mxu0 0.0
    %1394 = vmatprep.subr.mxu0 0.0
    %1395 = vmatpush1.msra.mxu0 0.0
    %1396 = vmatprep.subr.mxu0 0.0
    %1397 = vmatpush1.msra.mxu0 0.0
    %1398 = vmatprep.subr.mxu0 0.0
    %1399 = vmatpush1.msra.mxu0 0.0
    %1400 = vmatprep.subr.mxu0 0.0
    %1401 = vmatpush1.msra.mxu0 0.0
    %1402 = vmatprep.subr.mxu0 0.0
    %1403 = vmatpush1.msra.mxu0 0.0
    %1404 = vmatprep.subr.mxu0 0.0
    %1405 = vmatpush1.msra.mxu0 0.0
    %1406 = vmatprep.subr.mxu0 0.0
    %1407 = vmatpush1.msra.mxu0 0.0
    %1408 = vmatprep.subr.mxu0 0.0
    %1409 = vmatpush1.msra.mxu0 0.0
    %1410 = vmatprep.subr.mxu0 0.0
    %1411 = vmatpush1.msra.mxu0 0.0
    %1412 = vmatprep.subr.mxu0 0.0
    %1413 = vmatpush1.msra.mxu0 0.0
    %1414 = vmatprep.subr.mxu0 0.0
    %1415 = vmatpush1.msra.mxu0 0.0
    %1416 = vmatprep.subr.mxu0 0.0
    %1417 = vmatpush1.msra.mxu0 0.0
    %1418 = vmatprep.subr.mxu0 0.0
    %1419 = vmatpush1.msra.mxu0 0.0
    %1420 = vmatprep.subr.mxu0 0.0
    %1421 = vmatpush1.msra.mxu0 0.0
    %1422 = vmatprep.subr.mxu0 0.0
    %1423 = vmatpush1.msra.mxu0 %v112
    %1424 = vmatprep.subr.mxu0 0.0
    %1425 = vmatpush2.msra.mxu0 0.0
    %1426 = vmatprep.subr.mxu0 0.0
    %1427 = vmatpush2.msra.mxu0 0.0
    %1428 = vmatprep.subr.mxu0 0.0
    %1429 = vmatpush2.msra.mxu0 0.0
    %1430 = vmatprep.subr.mxu0 0.0
    %1431 = vmatpush2.msra.mxu0 0.0
    %1432 = vmatprep.subr.mxu0 0.0
    %1433 = vmatpush2.msra.mxu0 0.0
    %1434 = vmatprep.subr.mxu0 0.0
    %1435 = vmatpush2.msra.mxu0 0.0
    %1436 = vmatprep.subr.mxu0 0.0
    %1437 = vmatpush2.msra.mxu0 0.0
    %1438 = vmatprep.subr.mxu0 0.0
    %1439 = vmatpush2.msra.mxu0 0.0
    %1440 = vmatprep.subr.mxu0 0.0
    %1441 = vmatpush2.msra.mxu0 0.0
    %1442 = vmatprep.subr.mxu0 0.0
    %1443 = vmatpush2.msra.mxu0 0.0
    %1444 = vmatprep.subr.mxu0 0.0
    %1445 = vmatpush2.msra.mxu0 0.0
    %1446 = vmatprep.subr.mxu0 0.0
    %1447 = vmatpush2.msra.mxu0 0.0
    %1448 = vmatprep.subr.mxu0 0.0
    %1449 = vmatpush2.msra.mxu0 0.0
    %1450 = vmatprep.subr.mxu0 0.0
    %1451 = vmatpush2.msra.mxu0 0.0
    %1452 = vmatprep.subr.mxu0 0.0
    %1453 = vmatpush2.msra.mxu0 0.0
    %1454 = vmatprep.subr.mxu0 0.0
    %1455 = vmatpush2.msra.mxu0 0.0
    %1456 = vmatprep.mubr.f32.mxu0 0.0
    %1457 = vmatmul.mubr.f32.gmra.mxu0 %v1390
    %v1458 = vpop.f32.mrf.mxu0
    %v1459 = vadd.f32 0.0, %v1458
    %v1460 = vpop.f32.mrf.mxu0
    %1461 = vdwg.mxu0
    %v1462 = vlaneseq
    %v1463 = vshrl.u32 %v1462, 7
    %v1464 = vsub.s32 0, %v1463
    %v1465 = vrot.slane %v1459, %v1464
    %v1466 = vmul.f32 %v1248, %v1465
    %v1467 = vmul.f32 %v1249, %v1465
    %v1468 = vmul.f32 %v1250, %v1465
    %v1469 = vmul.f32 %v1251, %v1465
    %v1470 = vlaneseq
    %v1471 = vshrl.u32 %v1470, 7
    %v1472 = vsub.s32 1, %v1471
    %v1473 = vrot.slane %v1459, %v1472
    %v1474 = vadd.f32 %v1466, %v1473
    %v1475 = vadd.f32 %v1467, %v1473
    %v1476 = vadd.f32 %v1468, %v1473
    %v1477 = vadd.f32 %v1469, %v1473
    %v1478 = vld [vmem:[#allocation8] sm:$0xf]
    %v1479 = vld [vmem:[#allocation8 + $0x4] sm:$0xf]
    %v1480 = vld [vmem:[#allocation8 + $0x8] sm:$0xf]
    %v1481 = vld [vmem:[#allocation8 + $0xc] sm:$0xf]
    %v1482 = vld [vmem:[#allocation8 + $0x10] sm:$0xf]
    %v1483 = vld [vmem:[#allocation8 + $0x14] sm:$0xf]
    %v1484 = vld [vmem:[#allocation8 + $0x18] sm:$0xf]
    %v1485 = vld [vmem:[#allocation8 + $0x1c] sm:$0xf]
    %v1486 = vld [vmem:[#allocation8 + $0x20] sm:$0xf]
    %v1487 = vld [vmem:[#allocation8 + $0x24] sm:$0xf]
    %v1488 = vld [vmem:[#allocation8 + $0x28] sm:$0xf]
    %v1489 = vld [vmem:[#allocation8 + $0x2c] sm:$0xf]
    %v1490 = vld [vmem:[#allocation8 + $0x30] sm:$0xf]
    %v1491 = vld [vmem:[#allocation8 + $0x34] sm:$0xf]
    %v1492 = vld [vmem:[#allocation8 + $0x38] sm:$0xf]
    %v1493 = vld [vmem:[#allocation8 + $0x3c] sm:$0xf]
    %v1510 = vunpack.c.l.b16 %v1478
    %v1511 = vunpack.c.l.b16 %v1479
    %v1512 = vunpack.c.l.b16 %v1480
    %v1513 = vunpack.c.l.b16 %v1481
    %v1514 = vunpack.c.l.b16 %v1482
    %v1515 = vunpack.c.l.b16 %v1483
    %v1516 = vunpack.c.l.b16 %v1484
    %v1517 = vunpack.c.l.b16 %v1485
    %v1518 = vunpack.c.l.b16 %v1486
    %v1519 = vunpack.c.l.b16 %v1487
    %v1520 = vunpack.c.l.b16 %v1488
    %v1521 = vunpack.c.l.b16 %v1489
    %v1522 = vunpack.c.l.b16 %v1490
    %v1523 = vunpack.c.l.b16 %v1491
    %v1524 = vunpack.c.l.b16 %v1492
    %v1525 = vunpack.c.l.b16 %v1493
    %v1526 = vpack.c.b16 %v1511, %v1510
    %v1527 = vpack.c.b16 %v1513, %v1512
    %v1528 = vpack.c.b16 %v1515, %v1514
    %v1529 = vpack.c.b16 %v1517, %v1516
    %v1530 = vpack.c.b16 %v1519, %v1518
    %v1531 = vpack.c.b16 %v1521, %v1520
    %v1532 = vpack.c.b16 %v1523, %v1522
    %v1533 = vpack.c.b16 %v1525, %v1524
    %1542 = vmatprep.subr.bf16.mxu0 0
    %1543 = vmatpush1.bf16.msra.mxu0 %v1533
    %1544 = vmatprep.subr.bf16.mxu0 0
    %1545 = vmatpush1.bf16.msra.mxu0 %v1532
    %1546 = vmatprep.subr.bf16.mxu0 0
    %1547 = vmatpush1.bf16.msra.mxu0 %v1531
    %1548 = vmatprep.subr.bf16.mxu0 0
    %1549 = vmatpush1.bf16.msra.mxu0 %v1530
    %1550 = vmatprep.subr.bf16.mxu0 0
    %1551 = vmatpush1.bf16.msra.mxu0 %v1529
    %1552 = vmatprep.subr.bf16.mxu0 0
    %1553 = vmatpush1.bf16.msra.mxu0 %v1528
    %1554 = vmatprep.subr.bf16.mxu0 0
    %1555 = vmatpush1.bf16.msra.mxu0 %v1527
    %1556 = vmatprep.subr.bf16.mxu0 0
    %1557 = vmatpush1.bf16.msra.mxu0 %v1526
    %1558 = vmatprep.subr.bf16.mxu0 0
    %1559 = vmatpush2.bf16.msra.mxu0 0
    %1560 = vmatprep.subr.bf16.mxu0 0
    %1561 = vmatpush2.bf16.msra.mxu0 0
    %1562 = vmatprep.subr.bf16.mxu0 0
    %1563 = vmatpush2.bf16.msra.mxu0 0
    %1564 = vmatprep.subr.bf16.mxu0 0
    %1565 = vmatpush2.bf16.msra.mxu0 0
    %1566 = vmatprep.subr.bf16.mxu0 0
    %1567 = vmatpush2.bf16.msra.mxu0 0
    %1568 = vmatprep.subr.bf16.mxu0 0
    %1569 = vmatpush2.bf16.msra.mxu0 0
    %1570 = vmatprep.subr.bf16.mxu0 0
    %1571 = vmatpush2.bf16.msra.mxu0 0
    %1572 = vmatprep.subr.bf16.mxu0 0
    %1573 = vmatpush2.bf16.msra.mxu0 0
    %1574 = vmatprep.mubr.bf16.mxu0 0
    %1575 = vmatmul.mubr.bf16.gmra.mxu0 %v153
    %v1576 = vpop.f32.mrf.mxu0
    %v1577 = vadd.f32 0.0, %v1576
    %v1578 = vpop.f32.mrf.mxu0
    %v1579 = vpop.f32.mrf.mxu0
    %v1580 = vadd.f32 0.0, %v1579
    %v1581 = vpop.f32.mrf.mxu0
    %1582 = vmatprep.mubr.bf16.mxu0 0
    %1583 = vmatmul.mubr.bf16.gmra.mxu0 %v154
    %v1584 = vpop.f32.mrf.mxu0
    %v1585 = vadd.f32 0.0, %v1584
    %v1586 = vpop.f32.mrf.mxu0
    %v1587 = vpop.f32.mrf.mxu0
    %v1588 = vadd.f32 0.0, %v1587
    %v1589 = vpop.f32.mrf.mxu0
    %1590 = vdwg.mxu0
    %v1591 = vadd.f32 %v1577, %v1580
    %v1592 = vadd.f32 %v1591, %v1585
    %v1593 = vadd.f32 %v1592, %v1588
    %v1594 = vrot.slane %v1593, 4
    %v1595 = vadd.f32 %v1593, %v1594
    %v1596 = vrot.slane %v1595, 2
    %v1597 = vadd.f32 %v1595, %v1596
    %v1598 = vrot.slane %v1597, 1
    %v1599 = vadd.f32 %v1597, %v1598
    %v1600 = vmul.f32 %v1577, %v1577
    %v1601 = vmul.f32 %v1580, %v1580
    %v1602 = vmul.f32 %v1585, %v1585
    %v1603 = vmul.f32 %v1588, %v1588
    %v1604 = vadd.f32 %v1600, %v1601
    %v1605 = vadd.f32 %v1604, %v1602
    %v1606 = vadd.f32 %v1605, %v1603
    %v1607 = vrot.slane %v1606, 4
    %v1608 = vadd.f32 %v1606, %v1607
    %v1609 = vrot.slane %v1608, 2
    %v1610 = vadd.f32 %v1608, %v1609
    %v1611 = vrot.slane %v1610, 1
    %v1612 = vadd.f32 %v1610, %v1611
    %v1613 = vsel %vm598, %v1599, %v1612
    %1614 = vmatprep.subr.mxu0 0.0
    %1615 = vmatpush1.msra.mxu0 %v111
    %1616 = vmatprep.subr.mxu0 0.0
    %1617 = vmatpush1.msra.mxu0 %v110
    %1618 = vmatprep.subr.mxu0 0.0
    %1619 = vmatpush1.msra.mxu0 %v109
    %1620 = vmatprep.subr.mxu0 0.0
    %1621 = vmatpush1.msra.mxu0 %v108
    %1622 = vmatprep.subr.mxu0 0.0
    %1623 = vmatpush1.msra.mxu0 %v107
    %1624 = vmatprep.subr.mxu0 0.0
    %1625 = vmatpush1.msra.mxu0 %v106
    %1626 = vmatprep.subr.mxu0 0.0
    %1627 = vmatpush1.msra.mxu0 %v105
    %1628 = vmatprep.subr.mxu0 0.0
    %1629 = vmatpush1.msra.mxu0 %v104
    %1630 = vmatprep.subr.mxu0 0.0
    %1631 = vmatpush1.msra.mxu0 %v103
    %1632 = vmatprep.subr.mxu0 0.0
    %1633 = vmatpush1.msra.mxu0 %v102
    %1634 = vmatprep.subr.mxu0 0.0
    %1635 = vmatpush1.msra.mxu0 %v101
    %1636 = vmatprep.subr.mxu0 0.0
    %1637 = vmatpush1.msra.mxu0 %v100
    %1638 = vmatprep.subr.mxu0 0.0
    %1639 = vmatpush1.msra.mxu0 %v99
    %1640 = vmatprep.subr.mxu0 0.0
    %1641 = vmatpush1.msra.mxu0 %v98
    %1642 = vmatprep.subr.mxu0 0.0
    %1643 = vmatpush1.msra.mxu0 %v97
    %1644 = vmatprep.subr.mxu0 0.0
    %1645 = vmatpush1.msra.mxu0 %v96
    %1646 = vmatprep.subr.mxu0 0.0
    %1647 = vmatpush2.msra.mxu0 0.0
    %1648 = vmatprep.subr.mxu0 0.0
    %1649 = vmatpush2.msra.mxu0 0.0
    %1650 = vmatprep.subr.mxu0 0.0
    %1651 = vmatpush2.msra.mxu0 0.0
    %1652 = vmatprep.subr.mxu0 0.0
    %1653 = vmatpush2.msra.mxu0 0.0
    %1654 = vmatprep.subr.mxu0 0.0
    %1655 = vmatpush2.msra.mxu0 0.0
    %1656 = vmatprep.subr.mxu0 0.0
    %1657 = vmatpush2.msra.mxu0 0.0
    %1658 = vmatprep.subr.mxu0 0.0
    %1659 = vmatpush2.msra.mxu0 0.0
    %1660 = vmatprep.subr.mxu0 0.0
    %1661 = vmatpush2.msra.mxu0 0.0
    %1662 = vmatprep.subr.mxu0 0.0
    %1663 = vmatpush2.msra.mxu0 0.0
    %1664 = vmatprep.subr.mxu0 0.0
    %1665 = vmatpush2.msra.mxu0 0.0
    %1666 = vmatprep.subr.mxu0 0.0
    %1667 = vmatpush2.msra.mxu0 0.0
    %1668 = vmatprep.subr.mxu0 0.0
    %1669 = vmatpush2.msra.mxu0 0.0
    %1670 = vmatprep.subr.mxu0 0.0
    %1671 = vmatpush2.msra.mxu0 0.0
    %1672 = vmatprep.subr.mxu0 0.0
    %1673 = vmatpush2.msra.mxu0 0.0
    %1674 = vmatprep.subr.mxu0 0.0
    %1675 = vmatpush2.msra.mxu0 0.0
    %1676 = vmatprep.subr.mxu0 0.0
    %1677 = vmatpush2.msra.mxu0 0.0
    %1678 = vmatprep.mubr.f32.mxu0 0.0
    %1679 = vmatmul.mubr.f32.gmra.mxu0 %v1613
    %v1680 = vpop.f32.mrf.mxu0
    %v1681 = vadd.f32 0.0, %v1680
    %v1682 = vpop.f32.mrf.mxu0
    %1683 = vdwg.mxu0
    %v1684 = vmul.f32 %v1681, 0.001953125
    %v1685 = vmul.f32 %v1684, %v1684
    %v1687 = vrot.slane %v1685, 7
    %v1689 = vsub.f32 %v1684, %v1687
    %v1690 = vmax.f32 %v1689, 0.0
    %v1691 = vld [vmem:[%s11] sm:$0x1]
    %v1692 = vadd.f32 %v1690, 1e-05
    %v1693 = vrsqrt.pop %v1692
    %v1696 = vunpack.c.l.s4 1966171168
    %v1697 = vunpack.c.0.s8 %v1696
    %v1698 = vlaneseq
    %v1699 = vshrl.u32 %v1698, 7
    %v1700 = vsub.s32 %v1697, %v1699
    %v1701 = vrot.slane %v1693, %v1700
    %v1702 = vcombine.high %v1701, %v1701
    %v1704 = vunpack.c.l.s4 1966171168
    %v1705 = vunpack.c.0.s8 %v1704
    %v1706 = vlaneseq
    %v1707 = vshrl.u32 %v1706, 7
    %v1708 = vsub.s32 %v1705, %v1707
    %v1709 = vrot.slane %v1702, %v1708
    %v1711 = vmul.f32 %v1691, %v1709
    %v1712 = vld [vmem:[%s12] sm:$0x1]
    %v1713 = vmul.f32 %v1684, %v1711
    %v1714 = vsub.f32 %v1712, %v1713
    %v1716 = vlaneseq
    %v1717 = vshrl.u32 %v1716, 7
    %v1718 = vsub.s32 0, %v1717
    %v1719 = vrot.slane %v1711, %v1718
    %v1722 = vlaneseq
    %v1723 = vshrl.u32 %v1722, 7
    %v1724 = vsub.s32 0, %v1723
    %v1725 = vrot.slane %v1714, %v1724
    %v1727 = vsel %vm598, %v1719, %v1725
    %v1729 = vsel %vm714, %v1727, 0
    %1731 = vmatprep.subr.mxu0 0.0
    %1732 = vmatpush1.msra.mxu0 0.0
    %1733 = vmatprep.subr.mxu0 0.0
    %1734 = vmatpush1.msra.mxu0 0.0
    %1735 = vmatprep.subr.mxu0 0.0
    %1736 = vmatpush1.msra.mxu0 0.0
    %1737 = vmatprep.subr.mxu0 0.0
    %1738 = vmatpush1.msra.mxu0 0.0
    %1739 = vmatprep.subr.mxu0 0.0
    %1740 = vmatpush1.msra.mxu0 0.0
    %1741 = vmatprep.subr.mxu0 0.0
    %1742 = vmatpush1.msra.mxu0 0.0
    %1743 = vmatprep.subr.mxu0 0.0
    %1744 = vmatpush1.msra.mxu0 0.0
    %1745 = vmatprep.subr.mxu0 0.0
    %1746 = vmatpush1.msra.mxu0 0.0
    %1747 = vmatprep.subr.mxu0 0.0
    %1748 = vmatpush1.msra.mxu0 0.0
    %1749 = vmatprep.subr.mxu0 0.0
    %1750 = vmatpush1.msra.mxu0 0.0
    %1751 = vmatprep.subr.mxu0 0.0
    %1752 = vmatpush1.msra.mxu0 0.0
    %1753 = vmatprep.subr.mxu0 0.0
    %1754 = vmatpush1.msra.mxu0 0.0
    %1755 = vmatprep.subr.mxu0 0.0
    %1756 = vmatpush1.msra.mxu0 0.0
    %1757 = vmatprep.subr.mxu0 0.0
    %1758 = vmatpush1.msra.mxu0 0.0
    %1759 = vmatprep.subr.mxu0 0.0
    %1760 = vmatpush1.msra.mxu0 0.0
    %1761 = vmatprep.subr.mxu0 0.0
    %1762 = vmatpush1.msra.mxu0 %v112
    %1763 = vmatprep.subr.mxu0 0.0
    %1764 = vmatpush2.msra.mxu0 0.0
    %1765 = vmatprep.subr.mxu0 0.0
    %1766 = vmatpush2.msra.mxu0 0.0
    %1767 = vmatprep.subr.mxu0 0.0
    %1768 = vmatpush2.msra.mxu0 0.0
    %1769 = vmatprep.subr.mxu0 0.0
    %1770 = vmatpush2.msra.mxu0 0.0
    %1771 = vmatprep.subr.mxu0 0.0
    %1772 = vmatpush2.msra.mxu0 0.0
    %1773 = vmatprep.subr.mxu0 0.0
    %1774 = vmatpush2.msra.mxu0 0.0
    %1775 = vmatprep.subr.mxu0 0.0
    %1776 = vmatpush2.msra.mxu0 0.0
    %1777 = vmatprep.subr.mxu0 0.0
    %1778 = vmatpush2.msra.mxu0 0.0
    %1779 = vmatprep.subr.mxu0 0.0
    %1780 = vmatpush2.msra.mxu0 0.0
    %1781 = vmatprep.subr.mxu0 0.0
    %1782 = vmatpush2.msra.mxu0 0.0
    %1783 = vmatprep.subr.mxu0 0.0
    %1784 = vmatpush2.msra.mxu0 0.0
    %1785 = vmatprep.subr.mxu0 0.0
    %1786 = vmatpush2.msra.mxu0 0.0
    %1787 = vmatprep.subr.mxu0 0.0
    %1788 = vmatpush2.msra.mxu0 0.0
    %1789 = vmatprep.subr.mxu0 0.0
    %1790 = vmatpush2.msra.mxu0 0.0
    %1791 = vmatprep.subr.mxu0 0.0
    %1792 = vmatpush2.msra.mxu0 0.0
    %1793 = vmatprep.subr.mxu0 0.0
    %1794 = vmatpush2.msra.mxu0 0.0
    %1795 = vmatprep.mubr.f32.mxu0 0.0
    %1796 = vmatmul.mubr.f32.gmra.mxu0 %v1729
    %v1797 = vpop.f32.mrf.mxu0
    %v1798 = vadd.f32 0.0, %v1797
    %v1799 = vpop.f32.mrf.mxu0
    %1800 = vdwg.mxu0
    %v1801 = vlaneseq
    %v1802 = vshrl.u32 %v1801, 7
    %v1803 = vsub.s32 0, %v1802
    %v1804 = vrot.slane %v1798, %v1803
    %v1805 = vmul.f32 %v1577, %v1804
    %v1806 = vmul.f32 %v1580, %v1804
    %v1807 = vmul.f32 %v1585, %v1804
    %v1808 = vmul.f32 %v1588, %v1804
    %v1809 = vlaneseq
    %v1810 = vshrl.u32 %v1809, 7
    %v1811 = vsub.s32 1, %v1810
    %v1812 = vrot.slane %v1798, %v1811
    %v1813 = vadd.f32 %v1805, %v1812
    %v1814 = vadd.f32 %v1806, %v1812
    %v1815 = vadd.f32 %v1807, %v1812
    %v1816 = vadd.f32 %v1808, %v1812
    %v1817 = vadd.f32 %v1474, %v1813
    %v1818 = vadd.f32 %v1475, %v1814
    %v1819 = vadd.f32 %v1476, %v1815
    %v1820 = vadd.f32 %v1477, %v1816
    %v1821 = vmax.f32 %v1817, 0.0
    %v1822 = vmax.f32 %v1818, 0.0
    %v1823 = vmax.f32 %v1819, 0.0
    %v1824 = vmax.f32 %v1820, 0.0
    %1825 = vst [vmem:[%s13] sm:$0xff] %v1821
    %1826 = vst [vmem:[%s13 + $0x8] sm:$0xff] %v1822
    %1827 = vst [vmem:[%s13 + $0x10] sm:$0xff] %v1823
    %1828 = vst [vmem:[%s13 + $0x18] sm:$0xff] %v1824
    // Predicated region
    $region70: #{forward.1} parent=1 // pred_check
      _
    $region71: #{forward.1} parent=1 // pred_check_branch
      %1830 = sbr.rel (0) target = $region73
    $region72: #{forward.1} parent=1 // pred_region
      _
    $region73: #{forward.1} parent=1 // pred_fallthru
      _
    // Predicated region
    $region74: #{forward.1} parent=1 // pred_check
      _
    $region75: #{forward.1} parent=1 // pred_check_branch
      %1832 = sbr.rel (0) target = $region77
    $region76: #{forward.1} parent=1 // pred_region
      _
    $region77: #{forward.1} parent=1 // pred_fallthru
      _
    %1833 = vsyncpa [#allocation4], 1
    %1834 = vsyncpa [#allocation6], 1
    %1835 = vsyncpa [#allocation9], 1

</llo_original>
